<compile_context>
chip_gen: v7x
topology: tpu7x:2x2x1
jax: 0.10.0
libtpu: 0.0.40
codegen_flags: <defaults>
</compile_context>

<pallas_src>
import functools

import jax
import jax.numpy as jnp
from jax import lax
from jax.experimental import pallas as pl
from jax.experimental.pallas import tpu as pltpu

NUM_CLASSES = 2
ENC_DIM = 384      # encoder output / classifier input dim (nn.Linear(384, 256))
HID_DIM = 256
TOK_EMB_DIM = 16
VOCAB = 50

MAX_BATCH_TILE = 256      # MXU row fill on v6e/v7x (use 128 when tuning for v5e)
MAX_SPATIAL_TILE = 2048   # lanes of spectrogram streamed per k-step


def _round_up(x, m):
    return (x + m - 1) // m * m


def _feat_layout(n_channels, n_mfcc, n_art):
    """Sublane-aligned offsets of each modality inside the packed feature slab."""
    o_spec = 0
    o_mfcc = _round_up(o_spec + n_channels, 8)
    o_art = _round_up(o_mfcc + n_mfcc, 8)
    o_txt = _round_up(o_art + n_art, 8)
    k_pad = _round_up(o_txt + TOK_EMB_DIM, 8)
    return (o_spec, o_mfcc, o_art, o_txt), k_pad


def _fused_kernel(spec_ref, mfcc_ref, art_ref, ids_ref, mask_ref,
                  tok_emb_ref, w_enc_ref, be_ref, w1_ref, b1_ref,
                  w2_ref, b2_ref, o_ref, spec_acc,
                  *, hw_total, offs, k_pad, vocab):
    """Pooling + synthetic encoder + classifier MLP (eval mode)."""
    f32 = jnp.float32
    bf16 = jnp.bfloat16
    k = pl.program_id(1)
    nk = pl.num_programs(1)

    @pl.when(k == 0)
    def _():
        spec_acc[...] = jnp.zeros_like(spec_acc)

    # Streamed spectrogram reduction: bf16 tile in, f32 accumulate.
    spec_acc[...] += jnp.sum(spec_ref[...].astype(f32), axis=-1)      # (TB, C)

    @pl.when(k == nk - 1)
    def _():
        TB = o_ref.shape[0]

        # ---------------- per-modality pooled features -------------------
        spec_feat = spec_acc[...] * (1.0 / hw_total)                   # (TB, C)
        mfcc_feat = jnp.mean(mfcc_ref[...].astype(f32), axis=-1)       # (TB, n_mfcc)
        art_feat = art_ref[...]                                        # (TB, n_art) f32

        # --------- text branch: masked one-hot counts, sublane reduce ----
        ids = ids_ref[...]                                             # (TB, L) int32
        mask_f = mask_ref[...].astype(f32)                             # (TB, L)
        L = ids.shape[1]
        viota = lax.broadcasted_iota(jnp.int32, (TB, L, vocab), 2)
        onehot = jnp.where(ids[..., None] == viota,
                           mask_f[..., None], 0.0)                     # (TB, L, V)
        counts = jnp.sum(onehot, axis=1)                               # (TB, V)
        denom = jnp.maximum(jnp.sum(mask_f, axis=-1, keepdims=True), 1.0)
        # counts <= L: exact in bf16 for L <= 256.
        txt_sum = jnp.dot(counts.astype(bf16), tok_emb_ref[...],
                          preferred_element_type=f32)                  # (TB, E)
        txt_feat = txt_sum * pl.reciprocal(denom, approx=True)
        # TODO(synk): ids outside [0, VOCAB) are dropped by the one-hot compare
        # instead of clamped like a gather would; fine for valid vocab inputs.

        # --- pack features into one lane slab -> SINGLE encoder MXU dot ---
        feats = (spec_feat, mfcc_feat, art_feat, txt_feat)
        bounds = offs[1:] + (k_pad,)
        segs = []
        for f, off, nxt in zip(feats, offs, bounds):
            pad = (nxt - off) - f.shape[-1]
            if pad:
                f = jnp.concatenate([f, jnp.zeros((TB, pad), f32)], axis=-1)
            segs.append(f)
        feat_slab = jnp.concatenate(segs, axis=-1).astype(bf16)        # (TB, k_pad)

        combined = jnp.tanh(
            jnp.dot(feat_slab, w_enc_ref[...], preferred_element_type=f32)
            + be_ref[...])                                             # (TB, 384)

        # ---- classifier: Linear(384,256) -> ReLU -> Dropout -> Linear(256,2)
        h = jnp.maximum(
            jnp.dot(combined.astype(bf16), w1_ref[...],
                    preferred_element_type=f32) + b1_ref[...], 0.0)
        # TODO(synk): nn.Dropout(0.3) is identity in eval mode; training-mode
        # stochastic masking (pltpu.prng_*) intentionally not emitted.
        out = jnp.dot(h.astype(bf16), w2_ref[...],
                      preferred_element_type=f32) + b2_ref[...]
        o_ref[...] = out.astype(o_ref.dtype)


@jax.jit
def dysarthria_classifier_forward(spectrogram, mfcc, articulatory, input_ids,
                                  attention_mask, params):
    """Mirrors DysarthriaClassifier.forward (eval mode)."""
    B, C, H, W = spectrogram.shape
    _, L = input_ids.shape
    n_mfcc, T = mfcc.shape[1], mfcc.shape[2]
    n_art = articulatory.shape[1]
    HW = H * W
    offs, k_pad = _feat_layout(C, n_mfcc, n_art)

    # ---- tile sizes: batch tile (parallel) and spectrogram lane tile (reduce)
    TB = min(MAX_BATCH_TILE, _round_up(B, 8))
    TK = min(MAX_SPATIAL_TILE, _round_up(HW, 128))
    B_pad = _round_up(B, TB)
    hw_pad = _round_up(HW, TK)
    nb, nk = B_pad // TB, hw_pad // TK

    # ---- wrapper-side casts / zero pads (metadata reshape + cheap pads) ----
    spec_r = spectrogram.reshape(B, C, HW).astype(jnp.bfloat16)   # halve DMA bytes
    mfcc_b = mfcc.astype(jnp.bfloat16)
    art_f = articulatory.astype(jnp.float32)
    ids = input_ids.astype(jnp.int32)
    mask = attention_mask.astype(jnp.int32)

    if hw_pad != HW:
        spec_r = jnp.pad(spec_r, ((0, 0), (0, 0), (0, hw_pad - HW)))
    if B_pad != B:
        pb = B_pad - B
        spec_r = jnp.pad(spec_r, ((0, pb), (0, 0), (0, 0)))
        mfcc_b = jnp.pad(mfcc_b, ((0, pb), (0, 0), (0, 0)))
        art_f = jnp.pad(art_f, ((0, pb), (0, 0)))
        ids = jnp.pad(ids, ((0, pb), (0, 0)))
        mask = jnp.pad(mask, ((0, pb), (0, 0)))

    operands = (spec_r, mfcc_b, art_f, ids, mask,
                params["tok_emb"], params["w_enc"], params["be"],
                params["w1"], params["b1"], params["w2"], params["b2"])

    def w_spec(shape):  # VMEM-resident weights: constant block index
        return pl.BlockSpec(shape, lambda b, k: (0,) * len(shape))

    in_specs = [
        pl.BlockSpec((TB, C, TK), lambda b, k: (b, 0, k)),        # spectrogram (tiled)
        pl.BlockSpec((TB, n_mfcc, T), lambda b, k: (b, 0, 0)),    # mfcc
        pl.BlockSpec((TB, n_art), lambda b, k: (b, 0)),           # articulatory
        pl.BlockSpec((TB, L), lambda b, k: (b, 0)),               # input_ids (L on lanes)
        pl.BlockSpec((TB, L), lambda b, k: (b, 0)),               # attention_mask
        w_spec((VOCAB, TOK_EMB_DIM)),
        w_spec((k_pad, ENC_DIM)),
        w_spec((1, ENC_DIM)),
        w_spec((ENC_DIM, HID_DIM)),
        w_spec((1, HID_DIM)),
        w_spec((HID_DIM, NUM_CLASSES)),
        w_spec((1, NUM_CLASSES)),
    ]
    out_specs = pl.BlockSpec((TB, NUM_CLASSES), lambda b, k: (b, 0))

    # Explicit scoped-VMEM budget: double-buffered tiles + resident weights,
    # 2x slack for lane padding, clamped to v7x's 64 MiB physical VMEM.
    tile_bytes = (2 * TB * C * TK * 2 + 2 * TB * n_mfcc * T * 2
                  + 2 * TB * n_art * 4 + 2 * 2 * TB * L * 4
                  + 2 * TB * NUM_CLASSES * 4 + TB * C * 4)
    weight_bytes = 2 * (VOCAB * TOK_EMB_DIM * 2 + k_pad * ENC_DIM * 2
                        + ENC_DIM * 4 + ENC_DIM * HID_DIM * 2 + HID_DIM * 4
                        + HID_DIM * NUM_CLASSES * 2 + NUM_CLASSES * 4)
    vmem_limit = int(min(64 << 20,
                         max(32 << 20, 2 * (tile_bytes + weight_bytes) + (4 << 20))))

    flops = (B_pad * C * hw_pad
             + 2 * B_pad * (L * VOCAB + VOCAB * TOK_EMB_DIM + k_pad * ENC_DIM
                            + ENC_DIM * HID_DIM + HID_DIM * NUM_CLASSES))
    bytes_accessed = (sum(int(x.size) * x.dtype.itemsize for x in operands)
                      + B_pad * NUM_CLASSES * 4)
    cost = pl.CostEstimate(flops=int(flops),
                           transcendentals=int(B_pad * (ENC_DIM + 1)),
                           bytes_accessed=int(bytes_accessed))

    out = pl.pallas_call(
        functools.partial(_fused_kernel, hw_total=float(HW), offs=offs,
                          k_pad=k_pad, vocab=VOCAB),
        out_shape=jax.ShapeDtypeStruct((B_pad, NUM_CLASSES), jnp.float32),
        grid_spec=pltpu.PrefetchScalarGridSpec(
            num_scalar_prefetch=0,
            grid=(nb, nk),
            in_specs=in_specs,
            out_specs=out_specs,
            scratch_shapes=[pltpu.VMEM((TB, C), jnp.float32)]),
        compiler_params=pltpu.CompilerParams(
            dimension_semantics=("parallel", "arbitrary"),
            vmem_limit_bytes=vmem_limit),
        cost_estimate=cost,
    )(*operands)
    return out[:B]


def init_params(n_channels, n_mfcc, n_art):
    """Deterministic parameter init (synthetic encoder; no checkpoint load).

    Matmul weights stored bf16 (MXU-native, half the HBM->VMEM bytes); biases f32.
    The four encoder slabs are pre-packed into one (k_pad, 384) bf16 matrix with
    zero rows at sublane-aligned offsets so the kernel does a single MXU dot.
    """
    keys = jax.random.split(jax.random.PRNGKey(42), 10)

    def w(k, shape, scale, dtype=jnp.bfloat16):
        return (scale * jax.random.normal(k, shape, dtype=jnp.float32)).astype(dtype)

    we_spec = w(keys[1], (n_channels, ENC_DIM), 0.05)
    we_mfcc = w(keys[2], (n_mfcc, ENC_DIM), 0.05)
    we_art = w(keys[3], (n_art, ENC_DIM), 0.05)
    we_txt = w(keys[4], (TOK_EMB_DIM, ENC_DIM), 0.05)

    offs, k_pad = _feat_layout(n_channels, n_mfcc, n_art)
    w_enc = jnp.zeros((k_pad, ENC_DIM), jnp.bfloat16)
    w_enc = w_enc.at[offs[0]:offs[0] + n_channels].set(we_spec)
    w_enc = w_enc.at[offs[1]:offs[1] + n_mfcc].set(we_mfcc)
    w_enc = w_enc.at[offs[2]:offs[2] + n_art].set(we_art)
    w_enc = w_enc.at[offs[3]:offs[3] + TOK_EMB_DIM].set(we_txt)

    return {
        "tok_emb": w(keys[0], (VOCAB, TOK_EMB_DIM), 0.05),
        "we_spec": we_spec, "we_mfcc": we_mfcc, "we_art": we_art, "we_txt": we_txt,
        "w_enc": w_enc,
        "be": w(keys[5], (1, ENC_DIM), 0.01, jnp.float32),
        "w1": w(keys[6], (ENC_DIM, HID_DIM), 0.05),
        "b1": w(keys[7], (1, HID_DIM), 0.01, jnp.float32),
        "w2": w(keys[8], (HID_DIM, NUM_CLASSES), 0.05),
        "b2": w(keys[9], (1, NUM_CLASSES), 0.01, jnp.float32),
    }


def _reference_forward(spectrogram, mfcc, articulatory, input_ids,
                       attention_mask, params):
    """Pure-JAX f32 reference (PyTorch-faithful) for correctness checking."""
    f32 = jnp.float32
    spec_feat = jnp.mean(spectrogram, axis=(2, 3))
    mfcc_feat = jnp.mean(mfcc, axis=2)
    art_feat = articulatory.astype(f32)
    tok_emb = params["tok_emb"].astype(f32)
    emb = tok_emb[input_ids]
    mask = attention_mask[..., None].astype(f32)
    txt_feat = jnp.sum(emb * mask, axis=1) / jnp.maximum(jnp.sum(mask, axis=1), 1.0)
    feat = jnp.concatenate([spec_feat, mfcc_feat, art_feat, txt_feat], axis=-1)
    we = jnp.concatenate([params["we_spec"], params["we_mfcc"],
                          params["we_art"], params["we_txt"]], axis=0).astype(f32)
    combined = jnp.tanh(feat @ we + params["be"])
    h = jnp.maximum(combined @ params["w1"].astype(f32) + params["b1"], 0.0)
    return h @ params["w2"].astype(f32) + params["b2"]


if __name__ == "__main__":
    key = jax.random.PRNGKey(0)
    k_spec, k_mfcc, k_art, k_ids = jax.random.split(key, 4)

    B, C, H, W = 2, 4, 16, 16      # spectrogram: NCHW
    N_MFCC, T = 20, 8              # mfcc: (B, n_mfcc, time)
    F_ART = 10                     # articulatory features
    L = 8                          # token sequence length

    spectrogram = jax.random.normal(k_spec, (B, C, H, W), dtype=jnp.float32)
    mfcc = jax.random.normal(k_mfcc, (B, N_MFCC, T), dtype=jnp.float32)
    articulatory = jax.random.normal(k_art, (B, F_ART), dtype=jnp.float32)
    input_ids = jax.random.randint(k_ids, (B, L), 0, VOCAB, dtype=jnp.int32)
    attention_mask = jnp.ones((B, L), dtype=jnp.int32).at[1, 5:].set(0)

    params = init_params(C, N_MFCC, F_ART)

    out = dysarthria_classifier_forward(spectrogram, mfcc, articulatory,
                                        input_ids, attention_mask, params)
    out = jax.block_until_ready(out)

    ref = _reference_forward(spectrogram, mfcc, articulatory, input_ids,
                             attention_mask, params)
    assert out.shape == (B, NUM_CLASSES)
    assert jnp.allclose(out, ref, atol=2e-2, rtol=2e-2), (
        "max abs diff %s" % jnp.max(jnp.abs(out - ref)))

    print("KERNEL_OK")
</pallas_src>

<mosaic_0001>
module attributes {stable_mosaic.version = 11 : i64} {
  func.func @_fused_kernel(%arg0: i32, %arg1: i32, %arg2: memref<8x4x256xbf16, #tpu.memory_space<vmem>>, %arg3: memref<8x20x8xbf16, #tpu.memory_space<vmem>>, %arg4: memref<8x10xf32, #tpu.memory_space<vmem>>, %arg5: memref<8x8xi32, #tpu.memory_space<vmem>>, %arg6: memref<8x8xi32, #tpu.memory_space<vmem>>, %arg7: memref<50x16xbf16, #tpu.memory_space<vmem>>, %arg8: memref<64x384xbf16, #tpu.memory_space<vmem>>, %arg9: memref<1x384xf32, #tpu.memory_space<vmem>>, %arg10: memref<384x256xbf16, #tpu.memory_space<vmem>>, %arg11: memref<1x256xf32, #tpu.memory_space<vmem>>, %arg12: memref<256x2xbf16, #tpu.memory_space<vmem>>, %arg13: memref<1x2xf32, #tpu.memory_space<vmem>>, %arg14: memref<8x2xf32, #tpu.memory_space<vmem>>, %arg15: memref<8x4xf32, #tpu.memory_space<vmem>>) attributes {dimension_semantics = [#tpu.dimension_semantics<parallel>, #tpu.dimension_semantics<arbitrary>], iteration_bounds = array<i64: 1, 1>, scalar_prefetch = 0 : i64, scratch_operands = 1 : i64, tpu.core_type = #tpu.core_type<tc>, window_params = [{transform_indices = @transform_0, window_bounds = array<i64: 8, 4, 256>}, {transform_indices = @transform_1, window_bounds = array<i64: 8, 20, 8>}, {transform_indices = @transform_2, window_bounds = array<i64: 8, 10>}, {transform_indices = @transform_3, window_bounds = array<i64: 8, 8>}, {transform_indices = @transform_4, window_bounds = array<i64: 8, 8>}, {pipeline_mode = #tpu.pipeline_mode<synchronous>, transform_indices = @transform_5, window_bounds = array<i64: 50, 16>}, {pipeline_mode = #tpu.pipeline_mode<synchronous>, transform_indices = @transform_6, window_bounds = array<i64: 64, 384>}, {pipeline_mode = #tpu.pipeline_mode<synchronous>, transform_indices = @transform_7, window_bounds = array<i64: 1, 384>}, {pipeline_mode = #tpu.pipeline_mode<synchronous>, transform_indices = @transform_8, window_bounds = array<i64: 384, 256>}, {pipeline_mode = #tpu.pipeline_mode<synchronous>, transform_indices = @transform_9, window_bounds = array<i64: 1, 256>}, {pipeline_mode = #tpu.pipeline_mode<synchronous>, transform_indices = @transform_10, window_bounds = array<i64: 256, 2>}, {pipeline_mode = #tpu.pipeline_mode<synchronous>, transform_indices = @transform_11, window_bounds = array<i64: 1, 2>}, {transform_indices = @transform_12, window_bounds = array<i64: 8, 2>}]} {
    %c0_i32 = arith.constant 0 : i32
    %0 = arith.cmpi eq, %arg1, %c0_i32 : i32
    %1 = arith.extui %0 : i1 to i32
    %c0_i32_0 = arith.constant 0 : i32
    %2 = arith.cmpi ne, %1, %c0_i32_0 : i32
    scf.if %2 {
      %cst_9 = arith.constant 0.000000e+00 : f32
      %12 = vector.broadcast %cst_9 : f32 to vector<8x4xf32>
      %c0_10 = arith.constant 0 : index
      %c0_11 = arith.constant 0 : index
      %13 = vector.load %arg15[%c0_10, %c0_11] : memref<8x4xf32, #tpu.memory_space<vmem>>, vector<8x4xf32>
      tpu.vector_store %arg15[%c0_10, %c0_11], %12 {strides = array<i32>} : memref<8x4xf32, #tpu.memory_space<vmem>>, vector<8x4xf32>,
    } else {
    }
    %c0 = arith.constant 0 : index
    %c0_1 = arith.constant 0 : index
    %3 = vector.load %arg15[%c0, %c0_1] : memref<8x4xf32, #tpu.memory_space<vmem>>, vector<8x4xf32>
    %c0_2 = arith.constant 0 : index
    %c0_3 = arith.constant 0 : index
    %c0_4 = arith.constant 0 : index
    %4 = vector.load %arg2[%c0_2, %c0_3, %c0_4] : memref<8x4x256xbf16, #tpu.memory_space<vmem>>, vector<8x4x256xbf16>
    %5 = arith.extf %4 : vector<8x4x256xbf16> to vector<8x4x256xf32>
    %cst = arith.constant dense<0.000000e+00> : vector<8x4xf32>
    %6 = vector.multi_reduction <add>, %5, %cst [2] : vector<8x4x256xf32> to vector<8x4xf32>
    %7 = arith.addf %3, %6 : vector<8x4xf32>
    %c0_5 = arith.constant 0 : index
    %c0_6 = arith.constant 0 : index
    %8 = vector.load %arg15[%c0_5, %c0_6] : memref<8x4xf32, #tpu.memory_space<vmem>>, vector<8x4xf32>
    tpu.vector_store %arg15[%c0_5, %c0_6], %7 {strides = array<i32>} : memref<8x4xf32, #tpu.memory_space<vmem>>, vector<8x4xf32>,
    %c0_i32_7 = arith.constant 0 : i32
    %9 = arith.cmpi eq, %arg1, %c0_i32_7 : i32
    %10 = arith.extui %9 : i1 to i32
    %c0_i32_8 = arith.constant 0 : i32
    %11 = arith.cmpi ne, %10, %c0_i32_8 : i32
    scf.if %11 {
      %c0_9 = arith.constant 0 : index
      %c0_10 = arith.constant 0 : index
      %12 = vector.load %arg15[%c0_9, %c0_10] : memref<8x4xf32, #tpu.memory_space<vmem>>, vector<8x4xf32>
      %cst_11 = arith.constant 3.906250e-03 : f32
      %13 = vector.broadcast %cst_11 : f32 to vector<8x4xf32>
      %14 = arith.mulf %12, %13 : vector<8x4xf32>
      %c0_12 = arith.constant 0 : index
      %c0_13 = arith.constant 0 : index
      %c0_14 = arith.constant 0 : index
      %15 = vector.load %arg3[%c0_12, %c0_13, %c0_14] : memref<8x20x8xbf16, #tpu.memory_space<vmem>>, vector<8x20x8xbf16>
      %16 = arith.extf %15 : vector<8x20x8xbf16> to vector<8x20x8xf32>
      %cst_15 = arith.constant dense<0.000000e+00> : vector<8x20xf32>
      %17 = vector.multi_reduction <add>, %16, %cst_15 [2] : vector<8x20x8xf32> to vector<8x20xf32>
      %cst_16 = arith.constant 8.000000e+00 : f32
      %18 = vector.broadcast %cst_16 : f32 to vector<8x20xf32>
      %19 = arith.divf %17, %18 : vector<8x20xf32>
      %c0_17 = arith.constant 0 : index
      %c0_18 = arith.constant 0 : index
      %20 = vector.load %arg4[%c0_17, %c0_18] : memref<8x10xf32, #tpu.memory_space<vmem>>, vector<8x10xf32>
      %c0_19 = arith.constant 0 : index
      %c0_20 = arith.constant 0 : index
      %21 = vector.load %arg5[%c0_19, %c0_20] : memref<8x8xi32, #tpu.memory_space<vmem>>, vector<8x8xi32>
      %c0_21 = arith.constant 0 : index
      %c0_22 = arith.constant 0 : index
      %22 = vector.load %arg6[%c0_21, %c0_22] : memref<8x8xi32, #tpu.memory_space<vmem>>, vector<8x8xi32>
      %23 = arith.sitofp %22 : vector<8x8xi32> to vector<8x8xf32>
      %24 = tpu.iota {dimensions = array<i32: 2>} : vector<8x8x50xi32>
      %25 = vector.shape_cast %21 : vector<8x8xi32> to vector<8x8x1xi32>
      %26 = vector.broadcast %25 : vector<8x8x1xi32> to vector<8x8x50xi32>
      %27 = arith.cmpi eq, %26, %24 : vector<8x8x50xi32>
      %28 = vector.shape_cast %23 : vector<8x8xf32> to vector<8x8x1xf32>
      %cst_23 = arith.constant 0.000000e+00 : f32
      %29 = vector.shape_cast %28 : vector<8x8x1xf32> to vector<8x8x1xf32>
      %30 = vector.broadcast %29 : vector<8x8x1xf32> to vector<8x8x50xf32>
      %31 = vector.broadcast %cst_23 : f32 to vector<8x8x50xf32>
      %32 = arith.select %27, %30, %31 : vector<8x8x50xi1>, vector<8x8x50xf32>
      %cst_24 = arith.constant dense<0.000000e+00> : vector<8x50xf32>
      %33 = vector.multi_reduction <add>, %32, %cst_24 [1] : vector<8x8x50xf32> to vector<8x50xf32>
      %cst_25 = arith.constant dense<0.000000e+00> : vector<8xf32>
      %34 = vector.multi_reduction <add>, %23, %cst_25 [1] : vector<8x8xf32> to vector<8xf32>
      %35 = vector.shape_cast %34 : vector<8xf32> to vector<8x1xf32>
      %cst_26 = arith.constant 1.000000e+00 : f32
      %36 = vector.broadcast %cst_26 : f32 to vector<8x1xf32>
      %37 = arith.maximumf %35, %36 : vector<8x1xf32>
      %38 = arith.truncf %33 : vector<8x50xf32> to vector<8x50xbf16>
      %c0_27 = arith.constant 0 : index
      %c0_28 = arith.constant 0 : index
      %39 = vector.load %arg7[%c0_27, %c0_28] : memref<50x16xbf16, #tpu.memory_space<vmem>>, vector<50x16xbf16>
      %cst_29 = arith.constant dense<0.000000e+00> : vector<8x16xf32>
      %40 = tpu.matmul %38, %39, %cst_29 {dimension_numbers = #tpu.dot_dimension_numbers<[1], [0], [0], [1], [0, 0, 1, 1], [], []>} : vector<8x50xbf16>, vector<50x16xbf16>, vector<8x16xf32> -> vector<8x16xf32>
      %41 = tpu.reciprocal %37 {approx = true} : vector<8x1xf32> -> vector<8x1xf32>
      %42 = vector.broadcast %41 : vector<8x1xf32> to vector<8x16xf32>
      %43 = arith.mulf %40, %42 : vector<8x16xf32>
      %cst_30 = arith.constant 0.000000e+00 : f32
      %44 = vector.broadcast %cst_30 : f32 to vector<8x4xf32>
      %45 = tpu.concatenate %14, %44 in 1 : vector<8x4xf32>, vector<8x4xf32> -> vector<8x8xf32>
      %cst_31 = arith.constant 0.000000e+00 : f32
      %46 = vector.broadcast %cst_31 : f32 to vector<8x4xf32>
      %47 = tpu.concatenate %19, %46 in 1 : vector<8x20xf32>, vector<8x4xf32> -> vector<8x24xf32>
      %cst_32 = arith.constant 0.000000e+00 : f32
      %48 = vector.broadcast %cst_32 : f32 to vector<8x6xf32>
      %49 = tpu.concatenate %20, %48 in 1 : vector<8x10xf32>, vector<8x6xf32> -> vector<8x16xf32>
      %50 = tpu.concatenate %45, %47, %49, %43 in 1 : vector<8x8xf32>, vector<8x24xf32>, vector<8x16xf32>, vector<8x16xf32> -> vector<8x64xf32>
      %51 = arith.truncf %50 : vector<8x64xf32> to vector<8x64xbf16>
      %c0_33 = arith.constant 0 : index
      %c0_34 = arith.constant 0 : index
      %52 = vector.load %arg8[%c0_33, %c0_34] : memref<64x384xbf16, #tpu.memory_space<vmem>>, vector<64x384xbf16>
      %cst_35 = arith.constant dense<0.000000e+00> : vector<8x384xf32>
      %53 = tpu.matmul %51, %52, %cst_35 {dimension_numbers = #tpu.dot_dimension_numbers<[1], [0], [0], [1], [0, 0, 1, 1], [], []>} : vector<8x64xbf16>, vector<64x384xbf16>, vector<8x384xf32> -> vector<8x384xf32>
      %c0_36 = arith.constant 0 : index
      %c0_37 = arith.constant 0 : index
      %54 = vector.load %arg9[%c0_36, %c0_37] : memref<1x384xf32, #tpu.memory_space<vmem>>, vector<1x384xf32>
      %55 = vector.broadcast %54 : vector<1x384xf32> to vector<8x384xf32>
      %56 = arith.addf %53, %55 : vector<8x384xf32>
      %57 = math.tanh %56 : vector<8x384xf32>
      %58 = arith.truncf %57 : vector<8x384xf32> to vector<8x384xbf16>
      %c0_38 = arith.constant 0 : index
      %c0_39 = arith.constant 0 : index
      %59 = vector.load %arg10[%c0_38, %c0_39] : memref<384x256xbf16, #tpu.memory_space<vmem>>, vector<384x256xbf16>
      %cst_40 = arith.constant dense<0.000000e+00> : vector<8x256xf32>
      %60 = tpu.matmul %58, %59, %cst_40 {dimension_numbers = #tpu.dot_dimension_numbers<[1], [0], [0], [1], [0, 0, 1, 1], [], []>} : vector<8x384xbf16>, vector<384x256xbf16>, vector<8x256xf32> -> vector<8x256xf32>
      %c0_41 = arith.constant 0 : index
      %c0_42 = arith.constant 0 : index
      %61 = vector.load %arg11[%c0_41, %c0_42] : memref<1x256xf32, #tpu.memory_space<vmem>>, vector<1x256xf32>
      %62 = vector.broadcast %61 : vector<1x256xf32> to vector<8x256xf32>
      %63 = arith.addf %60, %62 : vector<8x256xf32>
      %cst_43 = arith.constant 0.000000e+00 : f32
      %64 = vector.broadcast %cst_43 : f32 to vector<8x256xf32>
      %65 = arith.maximumf %63, %64 : vector<8x256xf32>
      %66 = arith.truncf %65 : vector<8x256xf32> to vector<8x256xbf16>
      %c0_44 = arith.constant 0 : index
      %c0_45 = arith.constant 0 : index
      %67 = vector.load %arg12[%c0_44, %c0_45] : memref<256x2xbf16, #tpu.memory_space<vmem>>, vector<256x2xbf16>
      %cst_46 = arith.constant dense<0.000000e+00> : vector<8x2xf32>
      %68 = tpu.matmul %66, %67, %cst_46 {dimension_numbers = #tpu.dot_dimension_numbers<[1], [0], [0], [1], [0, 0, 1, 1], [], []>} : vector<8x256xbf16>, vector<256x2xbf16>, vector<8x2xf32> -> vector<8x2xf32>
      %c0_47 = arith.constant 0 : index
      %c0_48 = arith.constant 0 : index
      %69 = vector.load %arg13[%c0_47, %c0_48] : memref<1x2xf32, #tpu.memory_space<vmem>>, vector<1x2xf32>
      %70 = vector.broadcast %69 : vector<1x2xf32> to vector<8x2xf32>
      %71 = arith.addf %68, %70 : vector<8x2xf32>
      %c0_49 = arith.constant 0 : index
      %c0_50 = arith.constant 0 : index
      %72 = vector.load %arg14[%c0_49, %c0_50] : memref<8x2xf32, #tpu.memory_space<vmem>>, vector<8x2xf32>
      tpu.vector_store %arg14[%c0_49, %c0_50], %71 {strides = array<i32>} : memref<8x2xf32, #tpu.memory_space<vmem>>, vector<8x2xf32>,
    } else {
    }
    return
  }
  func.func @transform_0(%arg0: i32, %arg1: i32) -> (i32, i32, i32) {
    %c0_i32 = arith.constant 0 : i32
    %c0_i32_0 = arith.constant 0 : i32
    return %arg0, %c0_i32, %arg1 : i32, i32, i32
  }
  func.func @transform_1(%arg0: i32, %arg1: i32) -> (i32, i32, i32) {
    %c0_i32 = arith.constant 0 : i32
    %c0_i32_0 = arith.constant 0 : i32
    %c0_i32_1 = arith.constant 0 : i32
    return %arg0, %c0_i32, %c0_i32_0 : i32, i32, i32
  }
  func.func @transform_2(%arg0: i32, %arg1: i32) -> (i32, i32) {
    %c0_i32 = arith.constant 0 : i32
    %c0_i32_0 = arith.constant 0 : i32
    return %arg0, %c0_i32 : i32, i32
  }
  func.func @transform_3(%arg0: i32, %arg1: i32) -> (i32, i32) {
    %c0_i32 = arith.constant 0 : i32
    %c0_i32_0 = arith.constant 0 : i32
    return %arg0, %c0_i32 : i32, i32
  }
  func.func @transform_4(%arg0: i32, %arg1: i32) -> (i32, i32) {
    %c0_i32 = arith.constant 0 : i32
    %c0_i32_0 = arith.constant 0 : i32
    return %arg0, %c0_i32 : i32, i32
  }
  func.func @transform_5(%arg0: i32, %arg1: i32) -> (i32, i32) {
    %c0_i32 = arith.constant 0 : i32
    %c0_i32_0 = arith.constant 0 : i32
    %c0_i32_1 = arith.constant 0 : i32
    return %c0_i32, %c0_i32_0 : i32, i32
  }
  func.func @transform_6(%arg0: i32, %arg1: i32) -> (i32, i32) {
    %c0_i32 = arith.constant 0 : i32
    %c0_i32_0 = arith.constant 0 : i32
    %c0_i32_1 = arith.constant 0 : i32
    return %c0_i32, %c0_i32_0 : i32, i32
  }
  func.func @transform_7(%arg0: i32, %arg1: i32) -> (i32, i32) {
    %c0_i32 = arith.constant 0 : i32
    %c0_i32_0 = arith.constant 0 : i32
    %c0_i32_1 = arith.constant 0 : i32
    return %c0_i32, %c0_i32_0 : i32, i32
  }
  func.func @transform_8(%arg0: i32, %arg1: i32) -> (i32, i32) {
    %c0_i32 = arith.constant 0 : i32
    %c0_i32_0 = arith.constant 0 : i32
    %c0_i32_1 = arith.constant 0 : i32
    return %c0_i32, %c0_i32_0 : i32, i32
  }
  func.func @transform_9(%arg0: i32, %arg1: i32) -> (i32, i32) {
    %c0_i32 = arith.constant 0 : i32
    %c0_i32_0 = arith.constant 0 : i32
    %c0_i32_1 = arith.constant 0 : i32
    return %c0_i32, %c0_i32_0 : i32, i32
  }
  func.func @transform_10(%arg0: i32, %arg1: i32) -> (i32, i32) {
    %c0_i32 = arith.constant 0 : i32
    %c0_i32_0 = arith.constant 0 : i32
    %c0_i32_1 = arith.constant 0 : i32
    return %c0_i32, %c0_i32_0 : i32, i32
  }
  func.func @transform_11(%arg0: i32, %arg1: i32) -> (i32, i32) {
    %c0_i32 = arith.constant 0 : i32
    %c0_i32_0 = arith.constant 0 : i32
    %c0_i32_1 = arith.constant 0 : i32
    return %c0_i32, %c0_i32_0 : i32, i32
  }
  func.func @transform_12(%arg0: i32, %arg1: i32) -> (i32, i32) {
    %c0_i32 = arith.constant 0 : i32
    %c0_i32_0 = arith.constant 0 : i32
    return %arg0, %c0_i32 : i32, i32
  }
}

</mosaic_0001>

<llo_original>
// kernel: dysarthria_classifier_forward.1
$region0: #{dysarthria_classifier_forward.1}
  #allocation0 [shape = 'u32[]', space=smem, size = 0x4, offset = 0x4, fixed_abs, tag = 'smem constant byte address 0x4 - core index']
  #allocation1 [shape = 'u32[144,128]{1,0:T(1,128)}', space=vmem, size = 0x12000, scoped, tag = 'internal scratch']
  #allocation2 [shape = 'f32[8,4]{1,0:T(8,128)}', space=vmem, size = 0x1000, scoped, tag = 'scratch operand']
  %s0 = inlined_call_operand.vmem [shape: bf16[8,4,256], index: 0, kind: input, shape index: {}]
  %s1 = inlined_call_operand.vmem [shape: bf16[8,20,8], index: 1, kind: input, shape index: {}]
  %s2 = inlined_call_operand.vmem [shape: f32[8,10], index: 2, kind: input, shape index: {}]
  %s3 = inlined_call_operand.vmem [shape: s32[8,8], index: 3, kind: input, shape index: {}]
  %s4 = inlined_call_operand.vmem [shape: s32[8,8], index: 4, kind: input, shape index: {}]
  %s5 = inlined_call_operand.vmem [shape: bf16[50,16], index: 5, kind: input, shape index: {}]
  %s6 = inlined_call_operand.vmem [shape: bf16[64,384], index: 6, kind: input, shape index: {}]
  %s7 = inlined_call_operand.vmem [shape: f32[1,384], index: 7, kind: input, shape index: {}]
  %s8 = inlined_call_operand.vmem [shape: bf16[384,256], index: 8, kind: input, shape index: {}]
  %s9 = inlined_call_operand.vmem [shape: f32[1,256], index: 9, kind: input, shape index: {}]
  %s10 = inlined_call_operand.vmem [shape: bf16[256,2], index: 10, kind: input, shape index: {}]
  %s11 = inlined_call_operand.vmem [shape: f32[1,2], index: 11, kind: input, shape index: {}]
  %s12 = inlined_call_operand.vmem [shape: f32[8,2], index: 12, kind: output, shape index: {}]
  %s13 = sld [smem:[#allocation0]]
  $region66: #{dysarthria_classifier_forward.1} parent=0
    _
  %s15 = ssub.s32 1, %s13
  %s16 = scalar_select 0, %s15, %s13
  // Predicated region
  $region2: #{dysarthria_classifier_forward.1} parent=0 // pred_check
    _
  $region3: #{dysarthria_classifier_forward.1} parent=0 // pred_check_branch
    %18 = sbr.rel (0) target = $region5
  $region4: #{dysarthria_classifier_forward.1} parent=0 // pred_region
    _
  $region5: #{dysarthria_classifier_forward.1} parent=0 // pred_fallthru
    _
  // Predicated region
  $region6: #{dysarthria_classifier_forward.1} parent=0 // pred_check
    _
  $region7: #{dysarthria_classifier_forward.1} parent=0 // pred_check_branch
    %20 = sbr.rel (0) target = $region9
  $region8: #{dysarthria_classifier_forward.1} parent=0 // pred_region
    _
  $region9: #{dysarthria_classifier_forward.1} parent=0 // pred_fallthru
    _
  // Predicated region
  $region10: #{dysarthria_classifier_forward.1} parent=0 // pred_check
    _
  $region11: #{dysarthria_classifier_forward.1} parent=0 // pred_check_branch
    %22 = sbr.rel (0) target = $region13
  $region12: #{dysarthria_classifier_forward.1} parent=0 // pred_region
    _
  $region13: #{dysarthria_classifier_forward.1} parent=0 // pred_fallthru
    _
  // Predicated region
  $region14: #{dysarthria_classifier_forward.1} parent=0 // pred_check
    _
  $region15: #{dysarthria_classifier_forward.1} parent=0 // pred_check_branch
    %24 = sbr.rel (0) target = $region17
  $region16: #{dysarthria_classifier_forward.1} parent=0 // pred_region
    _
  $region17: #{dysarthria_classifier_forward.1} parent=0 // pred_fallthru
    _
  // Predicated region
  $region18: #{dysarthria_classifier_forward.1} parent=0 // pred_check
    _
  $region19: #{dysarthria_classifier_forward.1} parent=0 // pred_check_branch
    %26 = sbr.rel (0) target = $region21
  $region20: #{dysarthria_classifier_forward.1} parent=0 // pred_region
    _
  $region21: #{dysarthria_classifier_forward.1} parent=0 // pred_fallthru
    _
  // Predicated region
  $region22: #{dysarthria_classifier_forward.1} parent=0 // pred_check
    _
  $region23: #{dysarthria_classifier_forward.1} parent=0 // pred_check_branch
    %28 = sbr.rel (0) target = $region25
  $region24: #{dysarthria_classifier_forward.1} parent=0 // pred_region
    _
  $region25: #{dysarthria_classifier_forward.1} parent=0 // pred_fallthru
    _
  // Predicated region
  $region26: #{dysarthria_classifier_forward.1} parent=0 // pred_check
    _
  $region27: #{dysarthria_classifier_forward.1} parent=0 // pred_check_branch
    %30 = sbr.rel (0) target = $region29
  $region28: #{dysarthria_classifier_forward.1} parent=0 // pred_region
    _
  $region29: #{dysarthria_classifier_forward.1} parent=0 // pred_fallthru
    _
  // Predicated region
  $region30: #{dysarthria_classifier_forward.1} parent=0 // pred_check
    _
  $region31: #{dysarthria_classifier_forward.1} parent=0 // pred_check_branch
    %32 = sbr.rel (0) target = $region33
  $region32: #{dysarthria_classifier_forward.1} parent=0 // pred_region
    _
  $region33: #{dysarthria_classifier_forward.1} parent=0 // pred_fallthru
    _
  // Predicated region
  $region34: #{dysarthria_classifier_forward.1} parent=0 // pred_check
    _
  $region35: #{dysarthria_classifier_forward.1} parent=0 // pred_check_branch
    %34 = sbr.rel (0) target = $region37
  $region36: #{dysarthria_classifier_forward.1} parent=0 // pred_region
    _
  $region37: #{dysarthria_classifier_forward.1} parent=0 // pred_fallthru
    _
  // Predicated region
  $region38: #{dysarthria_classifier_forward.1} parent=0 // pred_check
    _
  $region39: #{dysarthria_classifier_forward.1} parent=0 // pred_check_branch
    %36 = sbr.rel (0) target = $region41
  $region40: #{dysarthria_classifier_forward.1} parent=0 // pred_region
    _
  $region41: #{dysarthria_classifier_forward.1} parent=0 // pred_fallthru
    _
  // Predicated region
  $region42: #{dysarthria_classifier_forward.1} parent=0 // pred_check
    _
  $region43: #{dysarthria_classifier_forward.1} parent=0 // pred_check_branch
    %38 = sbr.rel (0) target = $region45
  $region44: #{dysarthria_classifier_forward.1} parent=0 // pred_region
    _
  $region45: #{dysarthria_classifier_forward.1} parent=0 // pred_fallthru
    _
  // Predicated region
  $region46: #{dysarthria_classifier_forward.1} parent=0 // pred_check
    _
  $region47: #{dysarthria_classifier_forward.1} parent=0 // pred_check_branch
    %40 = sbr.rel (0) target = $region49
  $region48: #{dysarthria_classifier_forward.1} parent=0 // pred_region
    _
  $region49: #{dysarthria_classifier_forward.1} parent=0 // pred_fallthru
    _
  %p42 = scmp.eq.s32.totalorder 0, 0
  // Predicated region
  $region50: #{dysarthria_classifier_forward.1} parent=0 // pred_check
    %p43 = pneg %p42
  $region51: #{dysarthria_classifier_forward.1} parent=0 // pred_check_branch
    %45 = sbr.rel (%p43) target = $region53
  $region52: #{dysarthria_classifier_forward.1} parent=0 // pred_region
    %vm46 = vcmask 31744
    %47 = vst.msk [vmem:[#allocation2] sm:$0xff] %vm46, 0.0
  $region53: #{dysarthria_classifier_forward.1} parent=0 // pred_fallthru
    _
  %v48 = vld [vmem:[#allocation2] sm:$0xff]
  %v49 = vld [vmem:[%s0] sm:$0xf]
  %v50 = vld [vmem:[%s0 + $0x4] sm:$0xf]
  %v51 = vld [vmem:[%s0 + $0x8] sm:$0xf]
  %v52 = vld [vmem:[%s0 + $0xc] sm:$0xf]
  %v53 = vld [vmem:[%s0 + $0x10] sm:$0xf]
  %v54 = vld [vmem:[%s0 + $0x14] sm:$0xf]
  %v55 = vld [vmem:[%s0 + $0x18] sm:$0xf]
  %v56 = vld [vmem:[%s0 + $0x1c] sm:$0xf]
  %v57 = vunpack.c.l.bf16 %v49
  %v58 = vunpack.c.l.bf16 %v50
  %v59 = vunpack.c.l.bf16 %v51
  %v60 = vunpack.c.l.bf16 %v52
  %v61 = vunpack.c.l.bf16 %v53
  %v62 = vunpack.c.l.bf16 %v54
  %v63 = vunpack.c.l.bf16 %v55
  %v64 = vunpack.c.l.bf16 %v56
  %v73 = vcombine.high %v57, %v57
  %v74 = vcombine.high %v58, %v58
  %v75 = vcombine.high %v59, %v59
  %v76 = vcombine.high %v60, %v60
  %v77 = vcombine.high %v61, %v61
  %v78 = vcombine.high %v62, %v62
  %v79 = vcombine.high %v63, %v63
  %v80 = vcombine.high %v64, %v64
  %vm89 = vcmask 1043456
  %v90 = vsel %vm89, %v57, 0.0
  %v91 = vsel %vm89, %v73, 0.0
  %v92 = vadd.f32 %v90, %v91
  %93 = vadd.xlane.f32.xlu0 %v92
  %v94 = vpop.xlane.xlu0 %93
  %v95 = vsel %vm89, %v58, 0.0
  %v96 = vsel %vm89, %v74, 0.0
  %v97 = vadd.f32 %v95, %v96
  %98 = vadd.xlane.f32.xlu0 %v97
  %v99 = vpop.xlane.xlu0 %98
  %v100 = vsel %vm89, %v59, 0.0
  %v101 = vsel %vm89, %v75, 0.0
  %v102 = vadd.f32 %v100, %v101
  %103 = vadd.xlane.f32.xlu0 %v102
  %v104 = vpop.xlane.xlu0 %103
  %v105 = vsel %vm89, %v60, 0.0
  %v106 = vsel %vm89, %v76, 0.0
  %v107 = vadd.f32 %v105, %v106
  %108 = vadd.xlane.f32.xlu0 %v107
  %v109 = vpop.xlane.xlu0 %108
  %v110 = vsel %vm89, %v61, 0.0
  %v111 = vsel %vm89, %v77, 0.0
  %v112 = vadd.f32 %v110, %v111
  %113 = vadd.xlane.f32.xlu0 %v112
  %v114 = vpop.xlane.xlu0 %113
  %v115 = vsel %vm89, %v62, 0.0
  %v116 = vsel %vm89, %v78, 0.0
  %v117 = vadd.f32 %v115, %v116
  %118 = vadd.xlane.f32.xlu0 %v117
  %v119 = vpop.xlane.xlu0 %118
  %v120 = vsel %vm89, %v63, 0.0
  %v121 = vsel %vm89, %v79, 0.0
  %v122 = vadd.f32 %v120, %v121
  %123 = vadd.xlane.f32.xlu0 %v122
  %v124 = vpop.xlane.xlu0 %123
  %v125 = vsel %vm89, %v64, 0.0
  %v126 = vsel %vm89, %v80, 0.0
  %v127 = vadd.f32 %v125, %v126
  %128 = vadd.xlane.f32.xlu0 %v127
  %v129 = vpop.xlane.xlu0 %128
  %v138 = vlaneseq
  %v139 = vand.u32 %v138, 127
  %v140 = vlaneseq
  %v141 = vshrl.u32 %v140, 7
  %v142 = vsub.s32 %v139, %v141
  %v143 = vrot.slane %v94, %v142
  %v144 = vlaneseq
  %v145 = vshrl.u32 %v144, 7
  %v146 = vsub.s32 %v139, %v145
  %v147 = vrot.slane %v99, %v146
  %v148 = vlaneseq
  %v149 = vshrl.u32 %v148, 7
  %v150 = vsub.s32 %v139, %v149
  %v151 = vrot.slane %v104, %v150
  %v152 = vlaneseq
  %v153 = vshrl.u32 %v152, 7
  %v154 = vsub.s32 %v139, %v153
  %v155 = vrot.slane %v109, %v154
  %v156 = vlaneseq
  %v157 = vshrl.u32 %v156, 7
  %v158 = vsub.s32 %v139, %v157
  %v159 = vrot.slane %v114, %v158
  %v160 = vlaneseq
  %v161 = vshrl.u32 %v160, 7
  %v162 = vsub.s32 %v139, %v161
  %v163 = vrot.slane %v119, %v162
  %v164 = vlaneseq
  %v165 = vshrl.u32 %v164, 7
  %v166 = vsub.s32 %v139, %v165
  %v167 = vrot.slane %v124, %v166
  %v168 = vlaneseq
  %v169 = vshrl.u32 %v168, 7
  %v170 = vsub.s32 %v139, %v169
  %v171 = vrot.slane %v129, %v170
  %vm172 = vcmask 1041409
  %v173 = vsel %vm172, %v147, %v143
  %vm174 = vcmask 1042434
  %v175 = vsel %vm174, %v151, %v173
  %vm176 = vcmask 1043459
  %v177 = vsel %vm176, %v155, %v175
  %vm178 = vcmask 1044484
  %v179 = vsel %vm178, %v159, %v177
  %vm180 = vcmask 1045509
  %v181 = vsel %vm180, %v163, %v179
  %vm182 = vcmask 1046534
  %v183 = vsel %vm182, %v167, %v181
  %vm184 = vcmask 1047559
  %v185 = vsel %vm184, %v171, %v183
  %v187 = vadd.f32 %v48, %v185
  %vm188 = vcmask 31744
  %189 = vst.msk [vmem:[#allocation2] sm:$0xff] %vm188, %v187
  // Predicated region
  $region54: #{dysarthria_classifier_forward.1} parent=0 // pred_check
    %p190 = pneg %p42
  $region55: #{dysarthria_classifier_forward.1} parent=0 // pred_check_branch
    %192 = sbr.rel (%p190) target = $region57
  $region56: #{dysarthria_classifier_forward.1} parent=0 // pred_region
    %v193 = vld [vmem:[#allocation2] sm:$0xff]
    %v194 = vmul.f32 %v193, 0.00390625
    %v195 = vld [vmem:[%s1] sm:$0xf]
    %v196 = vld [vmem:[%s1 + $0x4] sm:$0xf]
    %v197 = vld [vmem:[%s1 + $0x8] sm:$0x3]
    %v198 = vld [vmem:[%s1 + $0xc] sm:$0xf]
    %v199 = vld [vmem:[%s1 + $0x10] sm:$0xf]
    %v200 = vld [vmem:[%s1 + $0x14] sm:$0x3]
    %v201 = vld [vmem:[%s1 + $0x18] sm:$0xf]
    %v202 = vld [vmem:[%s1 + $0x1c] sm:$0xf]
    %v203 = vld [vmem:[%s1 + $0x20] sm:$0x3]
    %v204 = vld [vmem:[%s1 + $0x24] sm:$0xf]
    %v205 = vld [vmem:[%s1 + $0x28] sm:$0xf]
    %v206 = vld [vmem:[%s1 + $0x2c] sm:$0x3]
    %v207 = vld [vmem:[%s1 + $0x30] sm:$0xf]
    %v208 = vld [vmem:[%s1 + $0x34] sm:$0xf]
    %v209 = vld [vmem:[%s1 + $0x38] sm:$0x3]
    %v210 = vld [vmem:[%s1 + $0x3c] sm:$0xf]
    %v211 = vld [vmem:[%s1 + $0x40] sm:$0xf]
    %v212 = vld [vmem:[%s1 + $0x44] sm:$0x3]
    %v213 = vld [vmem:[%s1 + $0x48] sm:$0xf]
    %v214 = vld [vmem:[%s1 + $0x4c] sm:$0xf]
    %v215 = vld [vmem:[%s1 + $0x50] sm:$0x3]
    %v216 = vld [vmem:[%s1 + $0x54] sm:$0xf]
    %v217 = vld [vmem:[%s1 + $0x58] sm:$0xf]
    %v218 = vld [vmem:[%s1 + $0x5c] sm:$0x3]
    %v219 = vunpack.c.l.bf16 %v195
    %v220 = vunpack.c.l.bf16 %v196
    %v221 = vunpack.c.l.bf16 %v197
    %v222 = vunpack.c.l.bf16 %v198
    %v223 = vunpack.c.l.bf16 %v199
    %v224 = vunpack.c.l.bf16 %v200
    %v225 = vunpack.c.l.bf16 %v201
    %v226 = vunpack.c.l.bf16 %v202
    %v227 = vunpack.c.l.bf16 %v203
    %v228 = vunpack.c.l.bf16 %v204
    %v229 = vunpack.c.l.bf16 %v205
    %v230 = vunpack.c.l.bf16 %v206
    %v231 = vunpack.c.l.bf16 %v207
    %v232 = vunpack.c.l.bf16 %v208
    %v233 = vunpack.c.l.bf16 %v209
    %v234 = vunpack.c.l.bf16 %v210
    %v235 = vunpack.c.l.bf16 %v211
    %v236 = vunpack.c.l.bf16 %v212
    %v237 = vunpack.c.l.bf16 %v213
    %v238 = vunpack.c.l.bf16 %v214
    %v239 = vunpack.c.l.bf16 %v215
    %v240 = vunpack.c.l.bf16 %v216
    %v241 = vunpack.c.l.bf16 %v217
    %v242 = vunpack.c.l.bf16 %v218
    %vm243 = vcmask 64512
    %v244 = vsel %vm243, %v219, 0.0
    %245 = vadd.xlane.f32.xlu0 %v244
    %v246 = vpop.xlane.xlu0 %245
    %v247 = vsel %vm243, %v220, 0.0
    %248 = vadd.xlane.f32.xlu0 %v247
    %v249 = vpop.xlane.xlu0 %248
    %vm250 = vcmask 60416
    %v251 = vsel %vm250, %v221, 0.0
    %252 = vadd.xlane.f32.xlu0 %v251
    %v253 = vpop.xlane.xlu0 %252
    %v254 = vsel %vm243, %v222, 0.0
    %255 = vadd.xlane.f32.xlu0 %v254
    %v256 = vpop.xlane.xlu0 %255
    %v257 = vsel %vm243, %v223, 0.0
    %258 = vadd.xlane.f32.xlu0 %v257
    %v259 = vpop.xlane.xlu0 %258
    %v260 = vsel %vm250, %v224, 0.0
    %261 = vadd.xlane.f32.xlu0 %v260
    %v262 = vpop.xlane.xlu0 %261
    %v263 = vsel %vm243, %v225, 0.0
    %264 = vadd.xlane.f32.xlu0 %v263
    %v265 = vpop.xlane.xlu0 %264
    %v266 = vsel %vm243, %v226, 0.0
    %267 = vadd.xlane.f32.xlu0 %v266
    %v268 = vpop.xlane.xlu0 %267
    %v269 = vsel %vm250, %v227, 0.0
    %270 = vadd.xlane.f32.xlu0 %v269
    %v271 = vpop.xlane.xlu0 %270
    %v272 = vsel %vm243, %v228, 0.0
    %273 = vadd.xlane.f32.xlu0 %v272
    %v274 = vpop.xlane.xlu0 %273
    %v275 = vsel %vm243, %v229, 0.0
    %276 = vadd.xlane.f32.xlu0 %v275
    %v277 = vpop.xlane.xlu0 %276
    %v278 = vsel %vm250, %v230, 0.0
    %279 = vadd.xlane.f32.xlu0 %v278
    %v280 = vpop.xlane.xlu0 %279
    %v281 = vsel %vm243, %v231, 0.0
    %282 = vadd.xlane.f32.xlu0 %v281
    %v283 = vpop.xlane.xlu0 %282
    %v284 = vsel %vm243, %v232, 0.0
    %285 = vadd.xlane.f32.xlu0 %v284
    %v286 = vpop.xlane.xlu0 %285
    %v287 = vsel %vm250, %v233, 0.0
    %288 = vadd.xlane.f32.xlu0 %v287
    %v289 = vpop.xlane.xlu0 %288
    %v290 = vsel %vm243, %v234, 0.0
    %291 = vadd.xlane.f32.xlu0 %v290
    %v292 = vpop.xlane.xlu0 %291
    %v293 = vsel %vm243, %v235, 0.0
    %294 = vadd.xlane.f32.xlu0 %v293
    %v295 = vpop.xlane.xlu0 %294
    %v296 = vsel %vm250, %v236, 0.0
    %297 = vadd.xlane.f32.xlu0 %v296
    %v298 = vpop.xlane.xlu0 %297
    %v299 = vsel %vm243, %v237, 0.0
    %300 = vadd.xlane.f32.xlu0 %v299
    %v301 = vpop.xlane.xlu0 %300
    %v302 = vsel %vm243, %v238, 0.0
    %303 = vadd.xlane.f32.xlu0 %v302
    %v304 = vpop.xlane.xlu0 %303
    %v305 = vsel %vm250, %v239, 0.0
    %306 = vadd.xlane.f32.xlu0 %v305
    %v307 = vpop.xlane.xlu0 %306
    %v308 = vsel %vm243, %v240, 0.0
    %309 = vadd.xlane.f32.xlu0 %v308
    %v310 = vpop.xlane.xlu0 %309
    %v311 = vsel %vm243, %v241, 0.0
    %312 = vadd.xlane.f32.xlu0 %v311
    %v313 = vpop.xlane.xlu0 %312
    %v314 = vsel %vm250, %v242, 0.0
    %315 = vadd.xlane.f32.xlu0 %v314
    %v316 = vpop.xlane.xlu0 %315
    %v317 = vrcp.pop 8.0
    %v318 = vmul.f32 %v246, %v317
    %v319 = vmul.f32 %v249, %v317
    %v320 = vmul.f32 %v253, %v317
    %v321 = vmul.f32 %v256, %v317
    %v322 = vmul.f32 %v259, %v317
    %v323 = vmul.f32 %v262, %v317
    %v324 = vmul.f32 %v265, %v317
    %v325 = vmul.f32 %v268, %v317
    %v326 = vmul.f32 %v271, %v317
    %v327 = vmul.f32 %v274, %v317
    %v328 = vmul.f32 %v277, %v317
    %v329 = vmul.f32 %v280, %v317
    %v330 = vmul.f32 %v283, %v317
    %v331 = vmul.f32 %v286, %v317
    %v332 = vmul.f32 %v289, %v317
    %v333 = vmul.f32 %v292, %v317
    %v334 = vmul.f32 %v295, %v317
    %v335 = vmul.f32 %v298, %v317
    %v336 = vmul.f32 %v301, %v317
    %v337 = vmul.f32 %v304, %v317
    %v338 = vmul.f32 %v307, %v317
    %v339 = vmul.f32 %v310, %v317
    %v340 = vmul.f32 %v313, %v317
    %v341 = vmul.f32 %v316, %v317
    %v342 = vld [vmem:[%s2] sm:$0xff]
    %v343 = vld [vmem:[%s3] sm:$0xff]
    %v344 = vld [vmem:[%s4] sm:$0xff]
    %v345 = vcvt.s32.f32 %v344
    %v346 = vlaneseq
    %v347 = vshrl.u32 %v346, 7
    %v348 = vsub.s32 0, %v347
    %v349 = vrot.slane %v343, %v348
    %351 = vbcast.lane.b32.xlu0 %v349, 256
    %v352 = vpop.permute.xlu0 %351
    %v353 = vlaneseq
    %v354 = vshrl.u32 %v353, 7
    %v355 = vsub.s32 1, %v354
    %v356 = vrot.slane %v343, %v355
    %358 = vbcast.lane.b32.xlu0 %v356, 256
    %v359 = vpop.permute.xlu0 %358
    %v360 = vlaneseq
    %v361 = vshrl.u32 %v360, 7
    %v362 = vsub.s32 2, %v361
    %v363 = vrot.slane %v343, %v362
    %365 = vbcast.lane.b32.xlu0 %v363, 256
    %v366 = vpop.permute.xlu0 %365
    %v367 = vlaneseq
    %v368 = vshrl.u32 %v367, 7
    %v369 = vsub.s32 3, %v368
    %v370 = vrot.slane %v343, %v369
    %372 = vbcast.lane.b32.xlu0 %v370, 256
    %v373 = vpop.permute.xlu0 %372
    %v374 = vlaneseq
    %v375 = vshrl.u32 %v374, 7
    %v376 = vsub.s32 4, %v375
    %v377 = vrot.slane %v343, %v376
    %379 = vbcast.lane.b32.xlu0 %v377, 256
    %v380 = vpop.permute.xlu0 %379
    %v381 = vlaneseq
    %v382 = vshrl.u32 %v381, 7
    %v383 = vsub.s32 5, %v382
    %v384 = vrot.slane %v343, %v383
    %386 = vbcast.lane.b32.xlu0 %v384, 256
    %v387 = vpop.permute.xlu0 %386
    %v388 = vlaneseq
    %v389 = vshrl.u32 %v388, 7
    %v390 = vsub.s32 6, %v389
    %v391 = vrot.slane %v343, %v390
    %393 = vbcast.lane.b32.xlu0 %v391, 256
    %v394 = vpop.permute.xlu0 %393
    %v395 = vlaneseq
    %v396 = vshrl.u32 %v395, 7
    %v397 = vsub.s32 7, %v396
    %v398 = vrot.slane %v343, %v397
    %400 = vbcast.lane.b32.xlu0 %v398, 256
    %v401 = vpop.permute.xlu0 %400
    %vm402 = vcmp.eq.s32.totalorder %v352, %v139
    %vm403 = vcmp.eq.s32.totalorder %v359, %v139
    %vm404 = vcmp.eq.s32.totalorder %v366, %v139
    %vm405 = vcmp.eq.s32.totalorder %v373, %v139
    %vm406 = vcmp.eq.s32.totalorder %v380, %v139
    %vm407 = vcmp.eq.s32.totalorder %v387, %v139
    %vm408 = vcmp.eq.s32.totalorder %v394, %v139
    %vm409 = vcmp.eq.s32.totalorder %v401, %v139
    %v410 = vlaneseq
    %v411 = vshrl.u32 %v410, 7
    %v412 = vsub.s32 0, %v411
    %v413 = vrot.slane %v345, %v412
    %415 = vbcast.lane.b32.xlu0 %v413, 256
    %v416 = vpop.permute.xlu0 %415
    %v417 = vlaneseq
    %v418 = vshrl.u32 %v417, 7
    %v419 = vsub.s32 1, %v418
    %v420 = vrot.slane %v345, %v419
    %422 = vbcast.lane.b32.xlu0 %v420, 256
    %v423 = vpop.permute.xlu0 %422
    %v424 = vlaneseq
    %v425 = vshrl.u32 %v424, 7
    %v426 = vsub.s32 2, %v425
    %v427 = vrot.slane %v345, %v426
    %429 = vbcast.lane.b32.xlu0 %v427, 256
    %v430 = vpop.permute.xlu0 %429
    %v431 = vlaneseq
    %v432 = vshrl.u32 %v431, 7
    %v433 = vsub.s32 3, %v432
    %v434 = vrot.slane %v345, %v433
    %436 = vbcast.lane.b32.xlu0 %v434, 256
    %v437 = vpop.permute.xlu0 %436
    %v438 = vlaneseq
    %v439 = vshrl.u32 %v438, 7
    %v440 = vsub.s32 4, %v439
    %v441 = vrot.slane %v345, %v440
    %443 = vbcast.lane.b32.xlu0 %v441, 256
    %v444 = vpop.permute.xlu0 %443
    %v445 = vlaneseq
    %v446 = vshrl.u32 %v445, 7
    %v447 = vsub.s32 5, %v446
    %v448 = vrot.slane %v345, %v447
    %450 = vbcast.lane.b32.xlu0 %v448, 256
    %v451 = vpop.permute.xlu0 %450
    %v452 = vlaneseq
    %v453 = vshrl.u32 %v452, 7
    %v454 = vsub.s32 6, %v453
    %v455 = vrot.slane %v345, %v454
    %457 = vbcast.lane.b32.xlu0 %v455, 256
    %v458 = vpop.permute.xlu0 %457
    %v459 = vlaneseq
    %v460 = vshrl.u32 %v459, 7
    %v461 = vsub.s32 7, %v460
    %v462 = vrot.slane %v345, %v461
    %464 = vbcast.lane.b32.xlu0 %v462, 256
    %v465 = vpop.permute.xlu0 %464
    %v466 = vsel %vm402, %v416, 0.0
    %v467 = vsel %vm403, %v423, 0.0
    %v468 = vsel %vm404, %v430, 0.0
    %v469 = vsel %vm405, %v437, 0.0
    %v470 = vsel %vm406, %v444, 0.0
    %v471 = vsel %vm407, %v451, 0.0
    %v472 = vsel %vm408, %v458, 0.0
    %v473 = vsel %vm409, %v465, 0.0
    %vm474 = vcmask 408576
    %v475 = vsel %vm474, %v466, 0.0
    %v476 = vrot.slane %v475, 4
    %v477 = vadd.f32 %v475, %v476
    %v478 = vrot.slane %v477, 2
    %v479 = vadd.f32 %v477, %v478
    %v480 = vrot.slane %v479, 1
    %v481 = vadd.f32 %v479, %v480
    %v482 = vsel %vm474, %v467, 0.0
    %v483 = vrot.slane %v482, 4
    %v484 = vadd.f32 %v482, %v483
    %v485 = vrot.slane %v484, 2
    %v486 = vadd.f32 %v484, %v485
    %v487 = vrot.slane %v486, 1
    %v488 = vadd.f32 %v486, %v487
    %v489 = vsel %vm474, %v468, 0.0
    %v490 = vrot.slane %v489, 4
    %v491 = vadd.f32 %v489, %v490
    %v492 = vrot.slane %v491, 2
    %v493 = vadd.f32 %v491, %v492
    %v494 = vrot.slane %v493, 1
    %v495 = vadd.f32 %v493, %v494
    %v496 = vsel %vm474, %v469, 0.0
    %v497 = vrot.slane %v496, 4
    %v498 = vadd.f32 %v496, %v497
    %v499 = vrot.slane %v498, 2
    %v500 = vadd.f32 %v498, %v499
    %v501 = vrot.slane %v500, 1
    %v502 = vadd.f32 %v500, %v501
    %v503 = vsel %vm474, %v470, 0.0
    %v504 = vrot.slane %v503, 4
    %v505 = vadd.f32 %v503, %v504
    %v506 = vrot.slane %v505, 2
    %v507 = vadd.f32 %v505, %v506
    %v508 = vrot.slane %v507, 1
    %v509 = vadd.f32 %v507, %v508
    %v510 = vsel %vm474, %v471, 0.0
    %v511 = vrot.slane %v510, 4
    %v512 = vadd.f32 %v510, %v511
    %v513 = vrot.slane %v512, 2
    %v514 = vadd.f32 %v512, %v513
    %v515 = vrot.slane %v514, 1
    %v516 = vadd.f32 %v514, %v515
    %v517 = vsel %vm474, %v472, 0.0
    %v518 = vrot.slane %v517, 4
    %v519 = vadd.f32 %v517, %v518
    %v520 = vrot.slane %v519, 2
    %v521 = vadd.f32 %v519, %v520
    %v522 = vrot.slane %v521, 1
    %v523 = vadd.f32 %v521, %v522
    %v524 = vsel %vm474, %v473, 0.0
    %v525 = vrot.slane %v524, 4
    %v526 = vadd.f32 %v524, %v525
    %v527 = vrot.slane %v526, 2
    %v528 = vadd.f32 %v526, %v527
    %v529 = vrot.slane %v528, 1
    %v530 = vadd.f32 %v528, %v529
    %v531 = vsel %vm243, %v345, 0.0
    %532 = vadd.xlane.f32.xlu0 %v531
    %v533 = vpop.xlane.xlu0 %532
    %v534 = vmax.f32 %v533, 1.0
    %v535 = vpack.c.bf16 %v481, %v481
    %v536 = vpack.c.bf16 %v488, %v488
    %v537 = vpack.c.bf16 %v495, %v495
    %v538 = vpack.c.bf16 %v502, %v502
    %v539 = vpack.c.bf16 %v509, %v509
    %v540 = vpack.c.bf16 %v516, %v516
    %v541 = vpack.c.bf16 %v523, %v523
    %v542 = vpack.c.bf16 %v530, %v530
    %v543 = vld [vmem:[%s5] sm:$0xf]
    %v544 = vld [vmem:[%s5 + $0x4] sm:$0xf]
    %v545 = vld [vmem:[%s5 + $0x8] sm:$0xf]
    %v546 = vld [vmem:[%s5 + $0xc] sm:$0xf]
    %v547 = vld [vmem:[%s5 + $0x10] sm:$0xf]
    %v548 = vld [vmem:[%s5 + $0x14] sm:$0xf]
    %v549 = vld [vmem:[%s5 + $0x18] sm:$0x1]
    %v558 = vunpack.c.l.b16 %v535
    %v559 = vunpack.c.l.b16 %v536
    %v560 = vunpack.c.l.b16 %v537
    %v561 = vunpack.c.l.b16 %v538
    %v562 = vunpack.c.l.b16 %v539
    %v563 = vunpack.c.l.b16 %v540
    %v564 = vunpack.c.l.b16 %v541
    %v565 = vunpack.c.l.b16 %v542
    %v566 = vsel %vm172, %v559, %v558
    %v567 = vsel %vm174, %v560, %v566
    %v568 = vsel %vm176, %v561, %v567
    %v569 = vsel %vm178, %v562, %v568
    %v570 = vsel %vm180, %v563, %v569
    %v571 = vsel %vm182, %v564, %v570
    %v572 = vsel %vm184, %v565, %v571
    %v573 = vpack.c.b16 %v572, %v572
    %v581 = vunpack.c.l.b16 %v543
    %v582 = vunpack.c.l.b16 %v544
    %v583 = vunpack.c.l.b16 %v545
    %v584 = vunpack.c.l.b16 %v546
    %v585 = vunpack.c.l.b16 %v547
    %v586 = vunpack.c.l.b16 %v548
    %v587 = vunpack.c.l.b16 %v549
    %v588 = vpack.c.b16 %v582, %v581
    %v589 = vpack.c.b16 %v584, %v583
    %v590 = vpack.c.b16 %v586, %v585
    %v591 = vpack.c.b16 %v587, %v587
    %v596 = vsel %vm474, %v573, 0
    %vm598 = vcmask 1040384
    %v600 = vsel %vm598, %v591, 0
    %602 = vmatprep.subr.bf16.mxu0 0
    %603 = vmatpush1.bf16.msra.mxu0 %v588
    %604 = vmatprep.subr.bf16.mxu0 0
    %605 = vmatpush1.bf16.msra.mxu0 %v589
    %606 = vmatprep.subr.bf16.mxu0 0
    %607 = vmatpush1.bf16.msra.mxu0 %v590
    %608 = vmatprep.subr.bf16.mxu0 0
    %609 = vmatpush1.bf16.msra.mxu0 %v600
    %610 = vmatprep.subr.bf16.mxu0 0
    %611 = vmatpush1.bf16.msra.mxu0 0
    %612 = vmatprep.subr.bf16.mxu0 0
    %613 = vmatpush1.bf16.msra.mxu0 0
    %614 = vmatprep.subr.bf16.mxu0 0
    %615 = vmatpush1.bf16.msra.mxu0 0
    %616 = vmatprep.subr.bf16.mxu0 0
    %617 = vmatpush1.bf16.msra.mxu0 0
    %618 = vmatprep.subr.bf16.mxu0 0
    %619 = vmatpush1.bf16.msra.mxu0 0
    %620 = vmatprep.subr.bf16.mxu0 0
    %621 = vmatpush1.bf16.msra.mxu0 0
    %622 = vmatprep.subr.bf16.mxu0 0
    %623 = vmatpush1.bf16.msra.mxu0 0
    %624 = vmatprep.subr.bf16.mxu0 0
    %625 = vmatpush1.bf16.msra.mxu0 0
    %626 = vmatprep.subr.bf16.mxu0 0
    %627 = vmatpush1.bf16.msra.mxu0 0
    %628 = vmatprep.subr.bf16.mxu0 0
    %629 = vmatpush1.bf16.msra.mxu0 0
    %630 = vmatprep.subr.bf16.mxu0 0
    %631 = vmatpush1.bf16.msra.mxu0 0
    %632 = vmatprep.subr.bf16.mxu0 0
    %633 = vmatpush1.bf16.msra.mxu0 0
    %634 = vmatprep.mubr.bf16.mxu0 0
    %635 = vmatmul.mubr.bf16.gmra.mrb[0].mxu0 %v596
    %v636 = vpop.f32.mrb[0].mxu0
    %v637 = vadd.f32 0.0, %v636
    %v638 = vpop.f32.mrb[0].mxu0
    %v639 = vpop.f32.mrb[0].mxu0
    %v640 = vpop.f32.mrb[0].mxu0
    %641 = vdwg.mxu0
    %v642 = vrcp.pop %v534
    %v643 = vmul.f32 %v637, %v642
    %v644 = vsel %vm188, %v194, 0.0
    %v669 = vlaneseq
    %v670 = vshrl.u32 %v669, 7
    %v671 = vsub.s32 %v139, %v670
    %v672 = vrot.slane %v318, %v671
    %v673 = vadd.s32 %v139, 4294967288
    %v674 = vlaneseq
    %v675 = vshrl.u32 %v674, 7
    %v676 = vsub.s32 %v673, %v675
    %v677 = vrot.slane %v319, %v676
    %vm678 = vcmask 130112
    %v679 = vsel %vm678, %v677, %v672
    %v680 = vadd.s32 %v139, 4294967280
    %v681 = vlaneseq
    %v682 = vshrl.u32 %v681, 7
    %v683 = vsub.s32 %v680, %v682
    %v684 = vrot.slane %v320, %v683
    %vm685 = vcmask 195712
    %v686 = vsel %vm685, %v684, %v679
    %v687 = vlaneseq
    %v688 = vshrl.u32 %v687, 7
    %v689 = vsub.s32 %v139, %v688
    %v690 = vrot.slane %v321, %v689
    %v691 = vlaneseq
    %v692 = vshrl.u32 %v691, 7
    %v693 = vsub.s32 %v673, %v692
    %v694 = vrot.slane %v322, %v693
    %v695 = vsel %vm678, %v694, %v690
    %v696 = vlaneseq
    %v697 = vshrl.u32 %v696, 7
    %v698 = vsub.s32 %v680, %v697
    %v699 = vrot.slane %v323, %v698
    %v700 = vsel %vm685, %v699, %v695
    %v701 = vlaneseq
    %v702 = vshrl.u32 %v701, 7
    %v703 = vsub.s32 %v139, %v702
    %v704 = vrot.slane %v324, %v703
    %v705 = vlaneseq
    %v706 = vshrl.u32 %v705, 7
    %v707 = vsub.s32 %v673, %v706
    %v708 = vrot.slane %v325, %v707
    %v709 = vsel %vm678, %v708, %v704
    %v710 = vlaneseq
    %v711 = vshrl.u32 %v710, 7
    %v712 = vsub.s32 %v680, %v711
    %v713 = vrot.slane %v326, %v712
    %v714 = vsel %vm685, %v713, %v709
    %v715 = vlaneseq
    %v716 = vshrl.u32 %v715, 7
    %v717 = vsub.s32 %v139, %v716
    %v718 = vrot.slane %v327, %v717
    %v719 = vlaneseq
    %v720 = vshrl.u32 %v719, 7
    %v721 = vsub.s32 %v673, %v720
    %v722 = vrot.slane %v328, %v721
    %v723 = vsel %vm678, %v722, %v718
    %v724 = vlaneseq
    %v725 = vshrl.u32 %v724, 7
    %v726 = vsub.s32 %v680, %v725
    %v727 = vrot.slane %v329, %v726
    %v728 = vsel %vm685, %v727, %v723
    %v729 = vlaneseq
    %v730 = vshrl.u32 %v729, 7
    %v731 = vsub.s32 %v139, %v730
    %v732 = vrot.slane %v330, %v731
    %v733 = vlaneseq
    %v734 = vshrl.u32 %v733, 7
    %v735 = vsub.s32 %v673, %v734
    %v736 = vrot.slane %v331, %v735
    %v737 = vsel %vm678, %v736, %v732
    %v738 = vlaneseq
    %v739 = vshrl.u32 %v738, 7
    %v740 = vsub.s32 %v680, %v739
    %v741 = vrot.slane %v332, %v740
    %v742 = vsel %vm685, %v741, %v737
    %v743 = vlaneseq
    %v744 = vshrl.u32 %v743, 7
    %v745 = vsub.s32 %v139, %v744
    %v746 = vrot.slane %v333, %v745
    %v747 = vlaneseq
    %v748 = vshrl.u32 %v747, 7
    %v749 = vsub.s32 %v673, %v748
    %v750 = vrot.slane %v334, %v749
    %v751 = vsel %vm678, %v750, %v746
    %v752 = vlaneseq
    %v753 = vshrl.u32 %v752, 7
    %v754 = vsub.s32 %v680, %v753
    %v755 = vrot.slane %v335, %v754
    %v756 = vsel %vm685, %v755, %v751
    %v757 = vlaneseq
    %v758 = vshrl.u32 %v757, 7
    %v759 = vsub.s32 %v139, %v758
    %v760 = vrot.slane %v336, %v759
    %v761 = vlaneseq
    %v762 = vshrl.u32 %v761, 7
    %v763 = vsub.s32 %v673, %v762
    %v764 = vrot.slane %v337, %v763
    %v765 = vsel %vm678, %v764, %v760
    %v766 = vlaneseq
    %v767 = vshrl.u32 %v766, 7
    %v768 = vsub.s32 %v680, %v767
    %v769 = vrot.slane %v338, %v768
    %v770 = vsel %vm685, %v769, %v765
    %v771 = vlaneseq
    %v772 = vshrl.u32 %v771, 7
    %v773 = vsub.s32 %v139, %v772
    %v774 = vrot.slane %v339, %v773
    %v775 = vlaneseq
    %v776 = vshrl.u32 %v775, 7
    %v777 = vsub.s32 %v673, %v776
    %v778 = vrot.slane %v340, %v777
    %v779 = vsel %vm678, %v778, %v774
    %v780 = vlaneseq
    %v781 = vshrl.u32 %v780, 7
    %v782 = vsub.s32 %v680, %v781
    %v783 = vrot.slane %v341, %v782
    %v784 = vsel %vm685, %v783, %v779
    %v785 = vsel %vm172, %v700, %v686
    %v786 = vsel %vm174, %v714, %v785
    %v787 = vsel %vm176, %v728, %v786
    %v788 = vsel %vm178, %v742, %v787
    %v789 = vsel %vm180, %v756, %v788
    %v790 = vsel %vm182, %v770, %v789
    %v791 = vsel %vm184, %v784, %v790
    %vm793 = vcmask 162816
    %v794 = vsel %vm793, %v791, 0.0
    %vm795 = vcmask 80896
    %v796 = vsel %vm795, %v342, 0.0
    %798 = vrot.lane.b32.xlu0 %v794, 8
    %v799 = vpop.permute.xlu0 %798
    %802 = vrot.lane.b32.xlu0 %v796, 32
    %v803 = vpop.permute.xlu0 %802
    %806 = vrot.lane.b32.xlu0 %v643, 48
    %v807 = vpop.permute.xlu0 %806
    %v809 = vsel %vm243, %v644, %v799
    %vm810 = vcmask 261120
    %v811 = vsel %vm810, %v809, %v803
    %vm812 = vcmask 392192
    %v813 = vsel %vm812, %v811, %v807
    %v814 = vpack.c.bf16 %v813, %v813
    %v815 = vld [vmem:[%s6] sm:$0xff]
    %v816 = vld [vmem:[%s6 + $0x8] sm:$0xf]
    %v817 = vld [vmem:[%s6 + $0xc] sm:$0xff]
    %v818 = vld [vmem:[%s6 + $0x14] sm:$0xf]
    %v819 = vld [vmem:[%s6 + $0x18] sm:$0xff]
    %v820 = vld [vmem:[%s6 + $0x20] sm:$0xf]
    %v821 = vld [vmem:[%s6 + $0x24] sm:$0xff]
    %v822 = vld [vmem:[%s6 + $0x2c] sm:$0xf]
    %v823 = vld [vmem:[%s6 + $0x30] sm:$0xff]
    %v824 = vld [vmem:[%s6 + $0x38] sm:$0xf]
    %v825 = vld [vmem:[%s6 + $0x3c] sm:$0xff]
    %v826 = vld [vmem:[%s6 + $0x44] sm:$0xf]
    %v827 = vld [vmem:[%s6 + $0x48] sm:$0xff]
    %v828 = vld [vmem:[%s6 + $0x50] sm:$0xf]
    %v829 = vld [vmem:[%s6 + $0x54] sm:$0xff]
    %v830 = vld [vmem:[%s6 + $0x5c] sm:$0xf]
    %v831 = vld [vmem:[%s7] sm:$0x7]
    %v833 = vlaneseq
    %v834 = vshrl.u32 %v833, 7
    %v835 = vsub.s32 0, %v834
    %v836 = vrot.slane %v831, %v835
    %v837 = vlaneseq
    %v838 = vshrl.u32 %v837, 7
    %v839 = vsub.s32 1, %v838
    %v840 = vrot.slane %v831, %v839
    %v841 = vlaneseq
    %v842 = vshrl.u32 %v841, 7
    %v843 = vsub.s32 2, %v842
    %v844 = vrot.slane %v831, %v843
    %v864 = vunpack.c.l.b16 %v815
    %v865 = vunpack.c.h.b16 %v815
    %v866 = vunpack.c.l.b16 %v816
    %v867 = vunpack.c.l.b16 %v817
    %v868 = vunpack.c.h.b16 %v817
    %v869 = vunpack.c.l.b16 %v818
    %v870 = vunpack.c.l.b16 %v819
    %v871 = vunpack.c.h.b16 %v819
    %v872 = vunpack.c.l.b16 %v820
    %v873 = vunpack.c.l.b16 %v821
    %v874 = vunpack.c.h.b16 %v821
    %v875 = vunpack.c.l.b16 %v822
    %v876 = vunpack.c.l.b16 %v823
    %v877 = vunpack.c.h.b16 %v823
    %v878 = vunpack.c.l.b16 %v824
    %v879 = vunpack.c.l.b16 %v825
    %v880 = vunpack.c.h.b16 %v825
    %v881 = vunpack.c.l.b16 %v826
    %v882 = vunpack.c.l.b16 %v827
    %v883 = vunpack.c.h.b16 %v827
    %v884 = vunpack.c.l.b16 %v828
    %v885 = vunpack.c.l.b16 %v829
    %v886 = vunpack.c.h.b16 %v829
    %v887 = vunpack.c.l.b16 %v830
    %v888 = vpack.c.b16 %v867, %v864
    %v889 = vpack.c.b16 %v868, %v865
    %v890 = vpack.c.b16 %v869, %v866
    %v891 = vpack.c.b16 %v873, %v870
    %v892 = vpack.c.b16 %v874, %v871
    %v893 = vpack.c.b16 %v875, %v872
    %v894 = vpack.c.b16 %v879, %v876
    %v895 = vpack.c.b16 %v880, %v877
    %v896 = vpack.c.b16 %v881, %v878
    %v897 = vpack.c.b16 %v885, %v882
    %v898 = vpack.c.b16 %v886, %v883
    %v899 = vpack.c.b16 %v887, %v884
    %vm912 = vcmask 523264
    %v914 = vsel %vm912, %v814, 0
    %916 = vmatprep.subr.bf16.mxu0 %v889
    %917 = vmatpush1.bf16.msra.mxu0 %v888
    %918 = vmatprep.subr.bf16.mxu0 %v892
    %919 = vmatpush1.bf16.msra.mxu0 %v891
    %920 = vmatprep.subr.bf16.mxu0 %v895
    %921 = vmatpush1.bf16.msra.mxu0 %v894
    %922 = vmatprep.subr.bf16.mxu0 %v898
    %923 = vmatpush1.bf16.msra.mxu0 %v897
    %924 = vmatprep.subr.bf16.mxu0 0
    %925 = vmatpush1.bf16.msra.mxu0 0
    %926 = vmatprep.subr.bf16.mxu0 0
    %927 = vmatpush1.bf16.msra.mxu0 0
    %928 = vmatprep.subr.bf16.mxu0 0
    %929 = vmatpush1.bf16.msra.mxu0 0
    %930 = vmatprep.subr.bf16.mxu0 0
    %931 = vmatpush1.bf16.msra.mxu0 0
    %932 = vmatprep.subr.bf16.mxu0 0
    %933 = vmatpush1.bf16.msra.mxu0 0
    %934 = vmatprep.subr.bf16.mxu0 0
    %935 = vmatpush1.bf16.msra.mxu0 0
    %936 = vmatprep.subr.bf16.mxu0 0
    %937 = vmatpush1.bf16.msra.mxu0 0
    %938 = vmatprep.subr.bf16.mxu0 0
    %939 = vmatpush1.bf16.msra.mxu0 0
    %940 = vmatprep.subr.bf16.mxu0 0
    %941 = vmatpush1.bf16.msra.mxu0 0
    %942 = vmatprep.subr.bf16.mxu0 0
    %943 = vmatpush1.bf16.msra.mxu0 0
    %944 = vmatprep.subr.bf16.mxu0 0
    %945 = vmatpush1.bf16.msra.mxu0 0
    %946 = vmatprep.subr.bf16.mxu0 0
    %947 = vmatpush1.bf16.msra.mxu0 0
    %948 = vmatprep.mubr.bf16.mxu0 0
    %949 = vmatmul.mubr.bf16.gmra.mrb[0].mxu0 %v914
    %v950 = vpop.f32.mrb[0].mxu0
    %v951 = vadd.f32 %v836, %v950
    %v952 = vpop.f32.mrb[0].mxu0
    %v953 = vadd.f32 %v840, %v952
    %v954 = vpop.f32.mrb[0].mxu0
    %v955 = vpop.f32.mrb[0].mxu0
    %956 = vdwg.mxu0
    %957 = vmatprep.subr.bf16.mxu0 0
    %958 = vmatpush1.bf16.msra.mxu0 %v890
    %959 = vmatprep.subr.bf16.mxu0 0
    %960 = vmatpush1.bf16.msra.mxu0 %v893
    %961 = vmatprep.subr.bf16.mxu0 0
    %962 = vmatpush1.bf16.msra.mxu0 %v896
    %963 = vmatprep.subr.bf16.mxu0 0
    %964 = vmatpush1.bf16.msra.mxu0 %v899
    %965 = vmatprep.subr.bf16.mxu0 0
    %966 = vmatpush1.bf16.msra.mxu0 0
    %967 = vmatprep.subr.bf16.mxu0 0
    %968 = vmatpush1.bf16.msra.mxu0 0
    %969 = vmatprep.subr.bf16.mxu0 0
    %970 = vmatpush1.bf16.msra.mxu0 0
    %971 = vmatprep.subr.bf16.mxu0 0
    %972 = vmatpush1.bf16.msra.mxu0 0
    %973 = vmatprep.subr.bf16.mxu0 0
    %974 = vmatpush1.bf16.msra.mxu0 0
    %975 = vmatprep.subr.bf16.mxu0 0
    %976 = vmatpush1.bf16.msra.mxu0 0
    %977 = vmatprep.subr.bf16.mxu0 0
    %978 = vmatpush1.bf16.msra.mxu0 0
    %979 = vmatprep.subr.bf16.mxu0 0
    %980 = vmatpush1.bf16.msra.mxu0 0
    %981 = vmatprep.subr.bf16.mxu0 0
    %982 = vmatpush1.bf16.msra.mxu0 0
    %983 = vmatprep.subr.bf16.mxu0 0
    %984 = vmatpush1.bf16.msra.mxu0 0
    %985 = vmatprep.subr.bf16.mxu0 0
    %986 = vmatpush1.bf16.msra.mxu0 0
    %987 = vmatprep.subr.bf16.mxu0 0
    %988 = vmatpush1.bf16.msra.mxu0 0
    %989 = vmatprep.mubr.bf16.mxu0 0
    %990 = vmatmul.mubr.bf16.gmra.mrb[0].mxu0 %v914
    %v991 = vpop.f32.mrb[0].mxu0
    %v992 = vadd.f32 %v844, %v991
    %v993 = vpop.f32.mrb[0].mxu0
    %v994 = vpop.f32.mrb[0].mxu0
    %v995 = vpop.f32.mrb[0].mxu0
    %996 = vdwg.mxu0
    %v997 = vtanh.pop %v951
    %v998 = vtanh.pop %v953
    %v999 = vtanh.pop %v992
    %v1000 = vpack.c.bf16 %v997, %v997
    %v1001 = vpack.c.bf16 %v998, %v998
    %v1002 = vpack.c.bf16 %v999, %v999
    %v1003 = vld [vmem:[%s8] sm:$0xff]
    %v1004 = vld [vmem:[%s8 + $0x8] sm:$0xff]
    %v1005 = vld [vmem:[%s8 + $0x10] sm:$0xff]
    %v1006 = vld [vmem:[%s8 + $0x18] sm:$0xff]
    %v1007 = vld [vmem:[%s8 + $0x20] sm:$0xff]
    %v1008 = vld [vmem:[%s8 + $0x28] sm:$0xff]
    %v1009 = vld [vmem:[%s8 + $0x30] sm:$0xff]
    %v1010 = vld [vmem:[%s8 + $0x38] sm:$0xff]
    %v1011 = vld [vmem:[%s8 + $0x40] sm:$0xff]
    %v1012 = vld [vmem:[%s8 + $0x48] sm:$0xff]
    %v1013 = vld [vmem:[%s8 + $0x50] sm:$0xff]
    %v1014 = vld [vmem:[%s8 + $0x58] sm:$0xff]
    %v1015 = vld [vmem:[%s8 + $0x60] sm:$0xff]
    %v1016 = vld [vmem:[%s8 + $0x68] sm:$0xff]
    %v1017 = vld [vmem:[%s8 + $0x70] sm:$0xff]
    %v1018 = vld [vmem:[%s8 + $0x78] sm:$0xff]
    %v1019 = vld [vmem:[%s8 + $0x80] sm:$0xff]
    %v1020 = vld [vmem:[%s8 + $0x88] sm:$0xff]
    %v1021 = vld [vmem:[%s8 + $0x90] sm:$0xff]
    %v1022 = vld [vmem:[%s8 + $0x98] sm:$0xff]
    %v1023 = vld [vmem:[%s8 + $0xa0] sm:$0xff]
    %v1024 = vld [vmem:[%s8 + $0xa8] sm:$0xff]
    %v1025 = vld [vmem:[%s8 + $0xb0] sm:$0xff]
    %v1026 = vld [vmem:[%s8 + $0xb8] sm:$0xff]
    %v1027 = vld [vmem:[%s8 + $0xc0] sm:$0xff]
    %v1028 = vld [vmem:[%s8 + $0xc8] sm:$0xff]
    %v1029 = vld [vmem:[%s8 + $0xd0] sm:$0xff]
    %v1030 = vld [vmem:[%s8 + $0xd8] sm:$0xff]
    %v1031 = vld [vmem:[%s8 + $0xe0] sm:$0xff]
    %v1032 = vld [vmem:[%s8 + $0xe8] sm:$0xff]
    %v1033 = vld [vmem:[%s8 + $0xf0] sm:$0xff]
    %v1034 = vld [vmem:[%s8 + $0xf8] sm:$0xff]
    %v1035 = vld [vmem:[%s8 + $0x100] sm:$0xff]
    %v1036 = vld [vmem:[%s8 + $0x108] sm:$0xff]
    %v1037 = vld [vmem:[%s8 + $0x110] sm:$0xff]
    %v1038 = vld [vmem:[%s8 + $0x118] sm:$0xff]
    %v1039 = vld [vmem:[%s8 + $0x120] sm:$0xff]
    %v1040 = vld [vmem:[%s8 + $0x128] sm:$0xff]
    %v1041 = vld [vmem:[%s8 + $0x130] sm:$0xff]
    %v1042 = vld [vmem:[%s8 + $0x138] sm:$0xff]
    %v1043 = vld [vmem:[%s8 + $0x140] sm:$0xff]
    %v1044 = vld [vmem:[%s8 + $0x148] sm:$0xff]
    %v1045 = vld [vmem:[%s8 + $0x150] sm:$0xff]
    %v1046 = vld [vmem:[%s8 + $0x158] sm:$0xff]
    %v1047 = vld [vmem:[%s8 + $0x160] sm:$0xff]
    %v1048 = vld [vmem:[%s8 + $0x168] sm:$0xff]
    %v1049 = vld [vmem:[%s8 + $0x170] sm:$0xff]
    %v1050 = vld [vmem:[%s8 + $0x178] sm:$0xff]
    %v1051 = vld [vmem:[%s9] sm:$0x3]
    %v1053 = vlaneseq
    %v1054 = vshrl.u32 %v1053, 7
    %v1055 = vsub.s32 0, %v1054
    %v1056 = vrot.slane %v1051, %v1055
    %v1057 = vlaneseq
    %v1058 = vshrl.u32 %v1057, 7
    %v1059 = vsub.s32 1, %v1058
    %v1060 = vrot.slane %v1051, %v1059
    %v1111 = vunpack.c.l.b16 %v1003
    %v1112 = vunpack.c.h.b16 %v1003
    %v1113 = vunpack.c.l.b16 %v1004
    %v1114 = vunpack.c.h.b16 %v1004
    %v1115 = vunpack.c.l.b16 %v1005
    %v1116 = vunpack.c.h.b16 %v1005
    %v1117 = vunpack.c.l.b16 %v1006
    %v1118 = vunpack.c.h.b16 %v1006
    %v1119 = vunpack.c.l.b16 %v1007
    %v1120 = vunpack.c.h.b16 %v1007
    %v1121 = vunpack.c.l.b16 %v1008
    %v1122 = vunpack.c.h.b16 %v1008
    %v1123 = vunpack.c.l.b16 %v1009
    %v1124 = vunpack.c.h.b16 %v1009
    %v1125 = vunpack.c.l.b16 %v1010
    %v1126 = vunpack.c.h.b16 %v1010
    %v1127 = vunpack.c.l.b16 %v1011
    %v1128 = vunpack.c.h.b16 %v1011
    %v1129 = vunpack.c.l.b16 %v1012
    %v1130 = vunpack.c.h.b16 %v1012
    %v1131 = vunpack.c.l.b16 %v1013
    %v1132 = vunpack.c.h.b16 %v1013
    %v1133 = vunpack.c.l.b16 %v1014
    %v1134 = vunpack.c.h.b16 %v1014
    %v1135 = vunpack.c.l.b16 %v1015
    %v1136 = vunpack.c.h.b16 %v1015
    %v1137 = vunpack.c.l.b16 %v1016
    %v1138 = vunpack.c.h.b16 %v1016
    %v1139 = vunpack.c.l.b16 %v1017
    %v1140 = vunpack.c.h.b16 %v1017
    %v1141 = vunpack.c.l.b16 %v1018
    %v1142 = vunpack.c.h.b16 %v1018
    %v1143 = vunpack.c.l.b16 %v1019
    %v1144 = vunpack.c.h.b16 %v1019
    %v1145 = vunpack.c.l.b16 %v1020
    %v1146 = vunpack.c.h.b16 %v1020
    %v1147 = vunpack.c.l.b16 %v1021
    %v1148 = vunpack.c.h.b16 %v1021
    %v1149 = vunpack.c.l.b16 %v1022
    %v1150 = vunpack.c.h.b16 %v1022
    %v1151 = vunpack.c.l.b16 %v1023
    %v1152 = vunpack.c.h.b16 %v1023
    %v1153 = vunpack.c.l.b16 %v1024
    %v1154 = vunpack.c.h.b16 %v1024
    %v1155 = vunpack.c.l.b16 %v1025
    %v1156 = vunpack.c.h.b16 %v1025
    %v1157 = vunpack.c.l.b16 %v1026
    %v1158 = vunpack.c.h.b16 %v1026
    %v1159 = vunpack.c.l.b16 %v1027
    %v1160 = vunpack.c.h.b16 %v1027
    %v1161 = vunpack.c.l.b16 %v1028
    %v1162 = vunpack.c.h.b16 %v1028
    %v1163 = vunpack.c.l.b16 %v1029
    %v1164 = vunpack.c.h.b16 %v1029
    %v1165 = vunpack.c.l.b16 %v1030
    %v1166 = vunpack.c.h.b16 %v1030
    %v1167 = vunpack.c.l.b16 %v1031
    %v1168 = vunpack.c.h.b16 %v1031
    %v1169 = vunpack.c.l.b16 %v1032
    %v1170 = vunpack.c.h.b16 %v1032
    %v1171 = vunpack.c.l.b16 %v1033
    %v1172 = vunpack.c.h.b16 %v1033
    %v1173 = vunpack.c.l.b16 %v1034
    %v1174 = vunpack.c.h.b16 %v1034
    %v1175 = vunpack.c.l.b16 %v1035
    %v1176 = vunpack.c.h.b16 %v1035
    %v1177 = vunpack.c.l.b16 %v1036
    %v1178 = vunpack.c.h.b16 %v1036
    %v1179 = vunpack.c.l.b16 %v1037
    %v1180 = vunpack.c.h.b16 %v1037
    %v1181 = vunpack.c.l.b16 %v1038
    %v1182 = vunpack.c.h.b16 %v1038
    %v1183 = vunpack.c.l.b16 %v1039
    %v1184 = vunpack.c.h.b16 %v1039
    %v1185 = vunpack.c.l.b16 %v1040
    %v1186 = vunpack.c.h.b16 %v1040
    %v1187 = vunpack.c.l.b16 %v1041
    %v1188 = vunpack.c.h.b16 %v1041
    %v1189 = vunpack.c.l.b16 %v1042
    %v1190 = vunpack.c.h.b16 %v1042
    %v1191 = vunpack.c.l.b16 %v1043
    %v1192 = vunpack.c.h.b16 %v1043
    %v1193 = vunpack.c.l.b16 %v1044
    %v1194 = vunpack.c.h.b16 %v1044
    %v1195 = vunpack.c.l.b16 %v1045
    %v1196 = vunpack.c.h.b16 %v1045
    %v1197 = vunpack.c.l.b16 %v1046
    %v1198 = vunpack.c.h.b16 %v1046
    %v1199 = vunpack.c.l.b16 %v1047
    %v1200 = vunpack.c.h.b16 %v1047
    %v1201 = vunpack.c.l.b16 %v1048
    %v1202 = vunpack.c.h.b16 %v1048
    %v1203 = vunpack.c.l.b16 %v1049
    %v1204 = vunpack.c.h.b16 %v1049
    %v1205 = vunpack.c.l.b16 %v1050
    %v1206 = vunpack.c.h.b16 %v1050
    %v1207 = vpack.c.b16 %v1113, %v1111
    %v1208 = vpack.c.b16 %v1114, %v1112
    %v1209 = vpack.c.b16 %v1117, %v1115
    %v1210 = vpack.c.b16 %v1118, %v1116
    %v1211 = vpack.c.b16 %v1121, %v1119
    %v1212 = vpack.c.b16 %v1122, %v1120
    %v1213 = vpack.c.b16 %v1125, %v1123
    %v1214 = vpack.c.b16 %v1126, %v1124
    %v1215 = vpack.c.b16 %v1129, %v1127
    %v1216 = vpack.c.b16 %v1130, %v1128
    %v1217 = vpack.c.b16 %v1133, %v1131
    %v1218 = vpack.c.b16 %v1134, %v1132
    %v1219 = vpack.c.b16 %v1137, %v1135
    %v1220 = vpack.c.b16 %v1138, %v1136
    %v1221 = vpack.c.b16 %v1141, %v1139
    %v1222 = vpack.c.b16 %v1142, %v1140
    %v1223 = vpack.c.b16 %v1145, %v1143
    %v1224 = vpack.c.b16 %v1146, %v1144
    %v1225 = vpack.c.b16 %v1149, %v1147
    %v1226 = vpack.c.b16 %v1150, %v1148
    %v1227 = vpack.c.b16 %v1153, %v1151
    %v1228 = vpack.c.b16 %v1154, %v1152
    %v1229 = vpack.c.b16 %v1157, %v1155
    %v1230 = vpack.c.b16 %v1158, %v1156
    %v1231 = vpack.c.b16 %v1161, %v1159
    %v1232 = vpack.c.b16 %v1162, %v1160
    %v1233 = vpack.c.b16 %v1165, %v1163
    %v1234 = vpack.c.b16 %v1166, %v1164
    %v1235 = vpack.c.b16 %v1169, %v1167
    %v1236 = vpack.c.b16 %v1170, %v1168
    %v1237 = vpack.c.b16 %v1173, %v1171
    %v1238 = vpack.c.b16 %v1174, %v1172
    %v1239 = vpack.c.b16 %v1177, %v1175
    %v1240 = vpack.c.b16 %v1178, %v1176
    %v1241 = vpack.c.b16 %v1181, %v1179
    %v1242 = vpack.c.b16 %v1182, %v1180
    %v1243 = vpack.c.b16 %v1185, %v1183
    %v1244 = vpack.c.b16 %v1186, %v1184
    %v1245 = vpack.c.b16 %v1189, %v1187
    %v1246 = vpack.c.b16 %v1190, %v1188
    %v1247 = vpack.c.b16 %v1193, %v1191
    %v1248 = vpack.c.b16 %v1194, %v1192
    %v1249 = vpack.c.b16 %v1197, %v1195
    %v1250 = vpack.c.b16 %v1198, %v1196
    %v1251 = vpack.c.b16 %v1201, %v1199
    %v1252 = vpack.c.b16 %v1202, %v1200
    %v1253 = vpack.c.b16 %v1205, %v1203
    %v1254 = vpack.c.b16 %v1206, %v1204
    %1303 = vmatprep.subr.bf16.mxu0 %v1208
    %1304 = vmatpush1.bf16.msra.mxu0 %v1207
    %1305 = vmatprep.subr.bf16.mxu0 %v1210
    %1306 = vmatpush1.bf16.msra.mxu0 %v1209
    %1307 = vmatprep.subr.bf16.mxu0 %v1212
    %1308 = vmatpush1.bf16.msra.mxu0 %v1211
    %1309 = vmatprep.subr.bf16.mxu0 %v1214
    %1310 = vmatpush1.bf16.msra.mxu0 %v1213
    %1311 = vmatprep.subr.bf16.mxu0 %v1216
    %1312 = vmatpush1.bf16.msra.mxu0 %v1215
    %1313 = vmatprep.subr.bf16.mxu0 %v1218
    %1314 = vmatpush1.bf16.msra.mxu0 %v1217
    %1315 = vmatprep.subr.bf16.mxu0 %v1220
    %1316 = vmatpush1.bf16.msra.mxu0 %v1219
    %1317 = vmatprep.subr.bf16.mxu0 %v1222
    %1318 = vmatpush1.bf16.msra.mxu0 %v1221
    %1319 = vmatprep.subr.bf16.mxu0 %v1224
    %1320 = vmatpush1.bf16.msra.mxu0 %v1223
    %1321 = vmatprep.subr.bf16.mxu0 %v1226
    %1322 = vmatpush1.bf16.msra.mxu0 %v1225
    %1323 = vmatprep.subr.bf16.mxu0 %v1228
    %1324 = vmatpush1.bf16.msra.mxu0 %v1227
    %1325 = vmatprep.subr.bf16.mxu0 %v1230
    %1326 = vmatpush1.bf16.msra.mxu0 %v1229
    %1327 = vmatprep.subr.bf16.mxu0 %v1232
    %1328 = vmatpush1.bf16.msra.mxu0 %v1231
    %1329 = vmatprep.subr.bf16.mxu0 %v1234
    %1330 = vmatpush1.bf16.msra.mxu0 %v1233
    %1331 = vmatprep.subr.bf16.mxu0 %v1236
    %1332 = vmatpush1.bf16.msra.mxu0 %v1235
    %1333 = vmatprep.subr.bf16.mxu0 %v1238
    %1334 = vmatpush1.bf16.msra.mxu0 %v1237
    %1335 = vmatprep.mubr.bf16.mxu0 %v1001
    %1336 = vmatmul.mubr.bf16.gmra.mrb[0].mxu0 %v1000
    %v1337 = vpop.f32.mrb[0].mxu0
    %v1338 = vadd.f32 %v1056, %v1337
    %v1339 = vpop.f32.mrb[0].mxu0
    %v1340 = vadd.f32 %v1060, %v1339
    %v1341 = vpop.f32.mrb[0].mxu0
    %v1342 = vpop.f32.mrb[0].mxu0
    %1343 = vdwg.mxu0
    %1344 = vmatprep.subr.bf16.mxu0 %v1240
    %1345 = vmatpush1.bf16.msra.mxu0 %v1239
    %1346 = vmatprep.subr.bf16.mxu0 %v1242
    %1347 = vmatpush1.bf16.msra.mxu0 %v1241
    %1348 = vmatprep.subr.bf16.mxu0 %v1244
    %1349 = vmatpush1.bf16.msra.mxu0 %v1243
    %1350 = vmatprep.subr.bf16.mxu0 %v1246
    %1351 = vmatpush1.bf16.msra.mxu0 %v1245
    %1352 = vmatprep.subr.bf16.mxu0 %v1248
    %1353 = vmatpush1.bf16.msra.mxu0 %v1247
    %1354 = vmatprep.subr.bf16.mxu0 %v1250
    %1355 = vmatpush1.bf16.msra.mxu0 %v1249
    %1356 = vmatprep.subr.bf16.mxu0 %v1252
    %1357 = vmatpush1.bf16.msra.mxu0 %v1251
    %1358 = vmatprep.subr.bf16.mxu0 %v1254
    %1359 = vmatpush1.bf16.msra.mxu0 %v1253
    %1360 = vmatprep.subr.bf16.mxu0 0
    %1361 = vmatpush1.bf16.msra.mxu0 0
    %1362 = vmatprep.subr.bf16.mxu0 0
    %1363 = vmatpush1.bf16.msra.mxu0 0
    %1364 = vmatprep.subr.bf16.mxu0 0
    %1365 = vmatpush1.bf16.msra.mxu0 0
    %1366 = vmatprep.subr.bf16.mxu0 0
    %1367 = vmatpush1.bf16.msra.mxu0 0
    %1368 = vmatprep.subr.bf16.mxu0 0
    %1369 = vmatpush1.bf16.msra.mxu0 0
    %1370 = vmatprep.subr.bf16.mxu0 0
    %1371 = vmatpush1.bf16.msra.mxu0 0
    %1372 = vmatprep.subr.bf16.mxu0 0
    %1373 = vmatpush1.bf16.msra.mxu0 0
    %1374 = vmatprep.subr.bf16.mxu0 0
    %1375 = vmatpush1.bf16.msra.mxu0 0
    %1376 = vmatprep.mubr.bf16.mxu0 0
    %1377 = vmatmul.mubr.bf16.gmra.mrb[0].mxu0 %v1002
    %v1378 = vpop.f32.mrb[0].mxu0
    %v1379 = vadd.f32 %v1338, %v1378
    %v1380 = vpop.f32.mrb[0].mxu0
    %v1381 = vadd.f32 %v1340, %v1380
    %v1382 = vpop.f32.mrb[0].mxu0
    %v1383 = vpop.f32.mrb[0].mxu0
    %1384 = vdwg.mxu0
    %v1385 = vmax.f32 %v1379, 0.0
    %v1386 = vmax.f32 %v1381, 0.0
    %v1387 = vpack.c.bf16 %v1385, %v1385
    %v1388 = vpack.c.bf16 %v1386, %v1386
    %v1389 = vld [vmem:[%s10] sm:$0xf]
    %v1390 = vld [vmem:[%s10 + $0x4] sm:$0xf]
    %v1391 = vld [vmem:[%s10 + $0x8] sm:$0xf]
    %v1392 = vld [vmem:[%s10 + $0xc] sm:$0xf]
    %v1393 = vld [vmem:[%s10 + $0x10] sm:$0xf]
    %v1394 = vld [vmem:[%s10 + $0x14] sm:$0xf]
    %v1395 = vld [vmem:[%s10 + $0x18] sm:$0xf]
    %v1396 = vld [vmem:[%s10 + $0x1c] sm:$0xf]
    %v1397 = vld [vmem:[%s10 + $0x20] sm:$0xf]
    %v1398 = vld [vmem:[%s10 + $0x24] sm:$0xf]
    %v1399 = vld [vmem:[%s10 + $0x28] sm:$0xf]
    %v1400 = vld [vmem:[%s10 + $0x2c] sm:$0xf]
    %v1401 = vld [vmem:[%s10 + $0x30] sm:$0xf]
    %v1402 = vld [vmem:[%s10 + $0x34] sm:$0xf]
    %v1403 = vld [vmem:[%s10 + $0x38] sm:$0xf]
    %v1404 = vld [vmem:[%s10 + $0x3c] sm:$0xf]
    %v1405 = vld [vmem:[%s10 + $0x40] sm:$0xf]
    %v1406 = vld [vmem:[%s10 + $0x44] sm:$0xf]
    %v1407 = vld [vmem:[%s10 + $0x48] sm:$0xf]
    %v1408 = vld [vmem:[%s10 + $0x4c] sm:$0xf]
    %v1409 = vld [vmem:[%s10 + $0x50] sm:$0xf]
    %v1410 = vld [vmem:[%s10 + $0x54] sm:$0xf]
    %v1411 = vld [vmem:[%s10 + $0x58] sm:$0xf]
    %v1412 = vld [vmem:[%s10 + $0x5c] sm:$0xf]
    %v1413 = vld [vmem:[%s10 + $0x60] sm:$0xf]
    %v1414 = vld [vmem:[%s10 + $0x64] sm:$0xf]
    %v1415 = vld [vmem:[%s10 + $0x68] sm:$0xf]
    %v1416 = vld [vmem:[%s10 + $0x6c] sm:$0xf]
    %v1417 = vld [vmem:[%s10 + $0x70] sm:$0xf]
    %v1418 = vld [vmem:[%s10 + $0x74] sm:$0xf]
    %v1419 = vld [vmem:[%s10 + $0x78] sm:$0xf]
    %v1420 = vld [vmem:[%s10 + $0x7c] sm:$0xf]
    %v1421 = vld [vmem:[%s11] sm:$0x1]
    %v1423 = vlaneseq
    %v1424 = vshrl.u32 %v1423, 7
    %v1425 = vsub.s32 0, %v1424
    %v1426 = vrot.slane %v1421, %v1425
    %v1460 = vunpack.c.l.b16 %v1389
    %v1461 = vunpack.c.l.b16 %v1390
    %v1462 = vunpack.c.l.b16 %v1391
    %v1463 = vunpack.c.l.b16 %v1392
    %v1464 = vunpack.c.l.b16 %v1393
    %v1465 = vunpack.c.l.b16 %v1394
    %v1466 = vunpack.c.l.b16 %v1395
    %v1467 = vunpack.c.l.b16 %v1396
    %v1468 = vunpack.c.l.b16 %v1397
    %v1469 = vunpack.c.l.b16 %v1398
    %v1470 = vunpack.c.l.b16 %v1399
    %v1471 = vunpack.c.l.b16 %v1400
    %v1472 = vunpack.c.l.b16 %v1401
    %v1473 = vunpack.c.l.b16 %v1402
    %v1474 = vunpack.c.l.b16 %v1403
    %v1475 = vunpack.c.l.b16 %v1404
    %v1476 = vunpack.c.l.b16 %v1405
    %v1477 = vunpack.c.l.b16 %v1406
    %v1478 = vunpack.c.l.b16 %v1407
    %v1479 = vunpack.c.l.b16 %v1408
    %v1480 = vunpack.c.l.b16 %v1409
    %v1481 = vunpack.c.l.b16 %v1410
    %v1482 = vunpack.c.l.b16 %v1411
    %v1483 = vunpack.c.l.b16 %v1412
    %v1484 = vunpack.c.l.b16 %v1413
    %v1485 = vunpack.c.l.b16 %v1414
    %v1486 = vunpack.c.l.b16 %v1415
    %v1487 = vunpack.c.l.b16 %v1416
    %v1488 = vunpack.c.l.b16 %v1417
    %v1489 = vunpack.c.l.b16 %v1418
    %v1490 = vunpack.c.l.b16 %v1419
    %v1491 = vunpack.c.l.b16 %v1420
    %v1492 = vpack.c.b16 %v1461, %v1460
    %v1493 = vpack.c.b16 %v1463, %v1462
    %v1494 = vpack.c.b16 %v1465, %v1464
    %v1495 = vpack.c.b16 %v1467, %v1466
    %v1496 = vpack.c.b16 %v1469, %v1468
    %v1497 = vpack.c.b16 %v1471, %v1470
    %v1498 = vpack.c.b16 %v1473, %v1472
    %v1499 = vpack.c.b16 %v1475, %v1474
    %v1500 = vpack.c.b16 %v1477, %v1476
    %v1501 = vpack.c.b16 %v1479, %v1478
    %v1502 = vpack.c.b16 %v1481, %v1480
    %v1503 = vpack.c.b16 %v1483, %v1482
    %v1504 = vpack.c.b16 %v1485, %v1484
    %v1505 = vpack.c.b16 %v1487, %v1486
    %v1506 = vpack.c.b16 %v1489, %v1488
    %v1507 = vpack.c.b16 %v1491, %v1490
    %1524 = vmatprep.subr.bf16.mxu0 0
    %1525 = vmatpush1.bf16.msra.mxu0 %v1492
    %1526 = vmatprep.subr.bf16.mxu0 0
    %1527 = vmatpush1.bf16.msra.mxu0 %v1493
    %1528 = vmatprep.subr.bf16.mxu0 0
    %1529 = vmatpush1.bf16.msra.mxu0 %v1494
    %1530 = vmatprep.subr.bf16.mxu0 0
    %1531 = vmatpush1.bf16.msra.mxu0 %v1495
    %1532 = vmatprep.subr.bf16.mxu0 0
    %1533 = vmatpush1.bf16.msra.mxu0 %v1496
    %1534 = vmatprep.subr.bf16.mxu0 0
    %1535 = vmatpush1.bf16.msra.mxu0 %v1497
    %1536 = vmatprep.subr.bf16.mxu0 0
    %1537 = vmatpush1.bf16.msra.mxu0 %v1498
    %1538 = vmatprep.subr.bf16.mxu0 0
    %1539 = vmatpush1.bf16.msra.mxu0 %v1499
    %1540 = vmatprep.subr.bf16.mxu0 0
    %1541 = vmatpush1.bf16.msra.mxu0 %v1500
    %1542 = vmatprep.subr.bf16.mxu0 0
    %1543 = vmatpush1.bf16.msra.mxu0 %v1501
    %1544 = vmatprep.subr.bf16.mxu0 0
    %1545 = vmatpush1.bf16.msra.mxu0 %v1502
    %1546 = vmatprep.subr.bf16.mxu0 0
    %1547 = vmatpush1.bf16.msra.mxu0 %v1503
    %1548 = vmatprep.subr.bf16.mxu0 0
    %1549 = vmatpush1.bf16.msra.mxu0 %v1504
    %1550 = vmatprep.subr.bf16.mxu0 0
    %1551 = vmatpush1.bf16.msra.mxu0 %v1505
    %1552 = vmatprep.subr.bf16.mxu0 0
    %1553 = vmatpush1.bf16.msra.mxu0 %v1506
    %1554 = vmatprep.subr.bf16.mxu0 0
    %1555 = vmatpush1.bf16.msra.mxu0 %v1507
    %1556 = vmatprep.mubr.bf16.mxu0 %v1388
    %1557 = vmatmul.mubr.bf16.gmra.mrb[0].mxu0 %v1387
    %v1558 = vpop.f32.mrb[0].mxu0
    %v1559 = vadd.f32 %v1426, %v1558
    %v1560 = vpop.f32.mrb[0].mxu0
    %v1561 = vpop.f32.mrb[0].mxu0
    %v1562 = vpop.f32.mrb[0].mxu0
    %1563 = vdwg.mxu0
    %vm1564 = vcmask 15360
    %1565 = vst.msk [vmem:[%s12] sm:$0xff] %vm1564, %v1559
  $region57: #{dysarthria_classifier_forward.1} parent=0 // pred_fallthru
    _
  // Predicated region
  $region58: #{dysarthria_classifier_forward.1} parent=0 // pred_check
    _
  $region59: #{dysarthria_classifier_forward.1} parent=0 // pred_check_branch
    %1567 = sbr.rel (0) target = $region61
  $region60: #{dysarthria_classifier_forward.1} parent=0 // pred_region
    _
  $region61: #{dysarthria_classifier_forward.1} parent=0 // pred_fallthru
    _
  // Predicated region
  $region62: #{dysarthria_classifier_forward.1} parent=0 // pred_check
    _
  $region63: #{dysarthria_classifier_forward.1} parent=0 // pred_check_branch
    %1569 = sbr.rel (0) target = $region65
  $region64: #{dysarthria_classifier_forward.1} parent=0 // pred_region
    _
  $region65: #{dysarthria_classifier_forward.1} parent=0 // pred_fallthru
    _

</llo_original>
